<compile_context>
chip_gen: v7x
topology: tpu7x:2x2x1
jax: 0.10.0
libtpu: 0.0.40
codegen_flags: <defaults>
</compile_context>

<pallas_src>
import functools
import math

import jax
import jax.numpy as jnp
from jax.experimental import pallas as pl
from jax.experimental.pallas import tpu as pltpu

BN_EPS = 1e-5
_NEG_BIG = -1e30  # "minus infinity" for masked (padded) class rows


def _round_up(v, m):
    return (v + m - 1) // m * m


def _bn_relu(h, gamma, beta):
    """BatchNorm1d training-mode forward (batch stats, biased var) + ReLU."""
    n = h.shape[0]
    s = jnp.sum(h, axis=0, keepdims=True)
    sq = jnp.sum(h * h, axis=0, keepdims=True)
    mu = s * (1.0 / n)
    var = jnp.maximum(sq * (1.0 / n) - mu * mu, 0.0)
    hn = (h - mu) * jax.lax.rsqrt(var + BN_EPS)
    return jnp.maximum(hn * gamma + beta, 0.0)


def _phase1_kernel(q_ref, x_ref, a_ref, w1_ref, b1_ref, g2_ref, be2_ref,
                   w2_ref, b2_ref, g3_ref, be3_ref, wl_ref, bl_ref,
                   logits_t_ref, acc_ref, colsum_ref):
    """Accumulate supX = Q^T @ x (and Q column sums) over pixel tiles; run the
    tiny superpixel chain once on the last grid step and emit transposed
    logits (NC_pad, S)."""
    f32 = jnp.float32
    i = pl.program_id(0)

    @pl.when(i == 0)
    def _init():
        acc_ref[...] = jnp.zeros_like(acc_ref)
        colsum_ref[...] = jnp.zeros_like(colsum_ref)

    q = q_ref[...]                                   # (tile_n, S) bf16
    x = x_ref[...]                                   # (tile_n, C) bf16

    # acc += Q_tile^T @ x_tile   (contract over the pixel rows of this tile)
    acc_ref[...] += jax.lax.dot_general(
        q, x, (((0,), (0,)), ((), ())), preferred_element_type=f32)

    # Column sums of Q, accumulated in the same pass.  Broadcast across the C
    # lanes (extra MXU flops are negligible for this memory-bound kernel and
    # it keeps everything as plain, well-supported elementwise/matmul ops).
    ones_x = jnp.ones_like(x)                        # (tile_n, C) bf16
    colsum_ref[...] += jax.lax.dot_general(
        q, ones_x, (((0,), (0,)), ((), ())), preferred_element_type=f32)

    @pl.when(i == pl.num_programs(0) - 1)
    def _finalize():
        # norm_col_Q.T @ x  ==  diag(1/colsum) @ (Q^T @ x)
        cs = colsum_ref[...]
        cs = jnp.where(cs > 0.0, cs, 1.0)   # guard empty Q columns (0-sum)
        sup = acc_ref[...] * (1.0 / cs)                      # (S, C) f32

        a = a_ref[...]

        # --- HGNN_conv 1 + BN(train) + ReLU (dropout p=0.0 is identity) ---
        h = jnp.dot(sup, w1_ref[...], preferred_element_type=f32) + b1_ref[...]
        h = jnp.dot(a, h, preferred_element_type=f32)
        h = _bn_relu(h, g2_ref[...], be2_ref[...])

        # --- HGNN_conv 2 + BN(train) + ReLU ---
        h = jnp.dot(h, w2_ref[...], preferred_element_type=f32) + b2_ref[...]
        h = jnp.dot(a, h, preferred_element_type=f32)
        h = _bn_relu(h, g3_ref[...], be3_ref[...])

        # Linear head, emitted transposed: logits_t[c, s] = (h @ Wlin + b)[s, c]
        logits_t = jax.lax.dot_general(
            wl_ref[...], h, (((0,), (1,)), ((), ())),
            preferred_element_type=f32) + bl_ref[...]
        logits_t_ref[...] = logits_t                         # (NC_pad, S)


def _phase2_kernel(logits_t_ref, q_ref, out_ref, *, num_classes):
    """out_t[:, tile] = softmax(Q_tile @ logits)^T  (pixels on the lane axis)."""
    f32 = jnp.float32
    q = q_ref[...].astype(f32)                               # (tile_n, S)
    lt = logits_t_ref[...]                                   # (NC_pad, S)

    # y_t[c, n] = sum_s logits[s, c] * Q[n, s]
    y = jax.lax.dot_general(lt, q, (((1,), (1,)), ((), ())),
                            preferred_element_type=f32)      # (NC_pad, tile_n)

    # Mask padded class rows so they vanish from the softmax.
    row = jax.lax.broadcasted_iota(jnp.int32, y.shape, 0)
    y = jnp.where(row < num_classes, y, jnp.float32(_NEG_BIG))

    m = jnp.max(y, axis=0, keepdims=True)
    e = jnp.exp(y - m)
    denom = jnp.sum(e, axis=0, keepdims=True)
    out_ref[...] = e * pl.reciprocal(denom, approx=True)


@functools.partial(jax.jit, static_argnames=("tile_n",))
def hgcn_forward(x, Q, A, params, *, tile_n=2048):
    """x: (H, W, C); Q: (H*W, S) nonnegative; A: (S, S). Returns (H*W, nc)."""
    f32 = jnp.float32
    h, w, c = x.shape
    n = h * w
    s = Q.shape[1]
    hidden = params["w1"].shape[1]
    d2 = params["w2"].shape[1]
    num_classes = params["lin_w"].shape[1]
    nc_pad = _round_up(num_classes, 8)

    # --- tile the pixel axis (multiple of 128 lanes for phase-2 stores) ---
    tile = min(tile_n, _round_up(n, 128))
    n_pad = _round_up(n, tile)
    grid = (n_pad // tile,)

    # Streamed, N-sized operands in bf16 (zero pad rows contribute nothing).
    q_b = Q.astype(jnp.bfloat16)
    x_b = x.reshape(n, c).astype(jnp.bfloat16)
    if n_pad != n:
        q_b = jnp.pad(q_b, ((0, n_pad - n), (0, 0)))
        x_b = jnp.pad(x_b, ((0, n_pad - n), (0, 0)))

    # Small resident operands stay f32.
    a_f = A.astype(f32)
    w1 = params["w1"].astype(f32)
    b1 = params["b1"].reshape(1, -1).astype(f32)
    g2 = params["bn2_g"].reshape(1, -1).astype(f32)
    be2 = params["bn2_b"].reshape(1, -1).astype(f32)
    w2 = params["w2"].astype(f32)
    b2 = params["b2"].reshape(1, -1).astype(f32)
    g3 = params["bn3_g"].reshape(1, -1).astype(f32)
    be3 = params["bn3_b"].reshape(1, -1).astype(f32)
    wl = params["lin_w"].astype(f32)
    bl = params["lin_b"].astype(f32)
    wl_pad = jnp.pad(wl, ((0, 0), (0, nc_pad - num_classes)))
    bl_pad = jnp.pad(bl, (0, nc_pad - num_classes)).reshape(nc_pad, 1)

    const = lambda bs: pl.BlockSpec(bs, lambda i: (0, 0))
    vmem_cap = 32 * 1024 * 1024

    # -------- phase 1: reduce over pixel tiles, run superpixel chain --------
    logits_t = pl.pallas_call(
        _phase1_kernel,
        out_shape=jax.ShapeDtypeStruct((nc_pad, s), f32),
        grid=grid,
        in_specs=[
            pl.BlockSpec((tile, s), lambda i: (i, 0)),     # Q tile
            pl.BlockSpec((tile, c), lambda i: (i, 0)),     # x tile
            const((s, s)),                                 # A
            const((c, hidden)), const((1, hidden)),        # W1, b1
            const((1, hidden)), const((1, hidden)),        # BN2 gamma, beta
            const((hidden, d2)), const((1, d2)),           # W2, b2
            const((1, d2)), const((1, d2)),                # BN3 gamma, beta
            const((d2, nc_pad)), const((nc_pad, 1)),       # Wlin, blin (padded)
        ],
        out_specs=pl.BlockSpec((nc_pad, s), lambda i: (0, 0)),
        scratch_shapes=[pltpu.VMEM((s, c), f32),           # supX accumulator
                        pltpu.VMEM((s, c), f32)],          # Q column sums
        compiler_params=pltpu.CompilerParams(
            dimension_semantics=("arbitrary",),
            vmem_limit_bytes=vmem_cap),
        cost_estimate=pl.CostEstimate(
            flops=int(4 * n_pad * s * c),
            transcendentals=0,
            bytes_accessed=int(n_pad * (s + c) * 2)),
    )(q_b, x_b, a_f, w1, b1, g2, be2, w2, b2, g3, be3, wl_pad, bl_pad)

    # -------- phase 2: expand back to pixels + softmax (lane-dense out) -----
    out_t = pl.pallas_call(
        functools.partial(_phase2_kernel, num_classes=num_classes),
        out_shape=jax.ShapeDtypeStruct((nc_pad, n_pad), f32),
        grid=grid,
        in_specs=[
            pl.BlockSpec((nc_pad, s), lambda i: (0, 0)),   # resident logits^T
            pl.BlockSpec((tile, s), lambda i: (i, 0)),     # Q tile
        ],
        out_specs=pl.BlockSpec((nc_pad, tile), lambda i: (0, i)),
        compiler_params=pltpu.CompilerParams(
            dimension_semantics=("parallel",),
            vmem_limit_bytes=vmem_cap),
        cost_estimate=pl.CostEstimate(
            flops=int(2 * n_pad * s * nc_pad),
            transcendentals=int(n_pad * nc_pad),
            bytes_accessed=int(n_pad * s * 2 + n_pad * nc_pad * 4)),
    )(logits_t, q_b)

    # Drop class / pixel padding and return (N, num_classes) like PyTorch.
    return out_t[:num_classes, :n].T


def init_params(key, input_dim, hidden_dim, num_classes):
    """Deterministic init mirroring the PyTorch module's reset_parameters."""
    ks = jax.random.split(key, 8)

    s1 = 1.0 / math.sqrt(hidden_dim)
    w1 = jax.random.uniform(ks[0], (input_dim, hidden_dim), jnp.float32, -s1, s1)
    b1 = jax.random.uniform(ks[1], (hidden_dim,), jnp.float32, -s1, s1)

    s2 = 1.0 / math.sqrt(64)
    w2 = jax.random.uniform(ks[2], (hidden_dim, 64), jnp.float32, -s2, s2)
    b2 = jax.random.uniform(ks[3], (64,), jnp.float32, -s2, s2)

    sl = 1.0 / math.sqrt(64)
    lin_w = jax.random.uniform(ks[4], (64, num_classes), jnp.float32, -sl, sl)
    lin_b = jax.random.uniform(ks[5], (num_classes,), jnp.float32, -sl, sl)

    return {
        "w1": w1, "b1": b1,
        "w2": w2, "b2": b2,
        "bn2_g": jnp.ones((hidden_dim,), jnp.float32),
        "bn2_b": jnp.zeros((hidden_dim,), jnp.float32),
        "bn3_g": jnp.ones((64,), jnp.float32),
        "bn3_b": jnp.zeros((64,), jnp.float32),
        "lin_w": lin_w, "lin_b": lin_b,
    }


if __name__ == "__main__":
    H, W, C = 16, 16, 32          # image (h, w, c); input_dim = C
    HIDDEN = 32
    NUM_CLASSES = 8
    S = 64                        # number of superpixels / hypergraph nodes
    N = H * W

    key = jax.random.PRNGKey(0)
    kx, kq, ka, kp = jax.random.split(key, 4)

    x = jax.random.normal(kx, (H, W, C), jnp.float32)
    # Q: nonnegative pixel->superpixel association (columns have positive sum)
    Q = jax.random.uniform(kq, (N, S), jnp.float32, 0.0, 1.0)
    A = jax.random.normal(ka, (S, S), jnp.float32) * 0.1

    params = init_params(kp, C, HIDDEN, NUM_CLASSES)

    out = hgcn_forward(x, Q, A, params)
    out = jax.block_until_ready(out)

    assert out.shape == (N, NUM_CLASSES)
    assert bool(jnp.all(jnp.isfinite(out)))
    # rows of a softmax sum to ~1 (approx reciprocal + bf16 streaming inputs)
    assert bool(jnp.allclose(jnp.sum(out, axis=-1), 1.0, atol=5e-3))
    print("KERNEL_OK")
</pallas_src>

<mosaic_0001>
module attributes {stable_mosaic.version = 11 : i64} {
  func.func @_phase2_kernel(%arg0: i32, %arg1: memref<8x64xf32, #tpu.memory_space<vmem>>, %arg2: memref<256x64xbf16, #tpu.memory_space<vmem>>, %arg3: memref<8x256xf32, #tpu.memory_space<vmem>>) attributes {dimension_semantics = [#tpu.dimension_semantics<parallel>], iteration_bounds = array<i64: 1>, scalar_prefetch = 0 : i64, scratch_operands = 0 : i64, tpu.core_type = #tpu.core_type<tc>, window_params = [{pipeline_mode = #tpu.pipeline_mode<synchronous>, transform_indices = @transform_0, window_bounds = array<i64: 8, 64>}, {transform_indices = @transform_1, window_bounds = array<i64: 256, 64>}, {transform_indices = @transform_2, window_bounds = array<i64: 8, 256>}]} {
    %c0 = arith.constant 0 : index
    %c0_0 = arith.constant 0 : index
    %0 = vector.load %arg2[%c0, %c0_0] : memref<256x64xbf16, #tpu.memory_space<vmem>>, vector<256x64xbf16>
    %1 = arith.extf %0 : vector<256x64xbf16> to vector<256x64xf32>
    %c0_1 = arith.constant 0 : index
    %c0_2 = arith.constant 0 : index
    %2 = vector.load %arg1[%c0_1, %c0_2] : memref<8x64xf32, #tpu.memory_space<vmem>>, vector<8x64xf32>
    %cst = arith.constant dense<0.000000e+00> : vector<8x256xf32>
    %3 = tpu.matmul %2, %1, %cst {dimension_numbers = #tpu.dot_dimension_numbers<[1], [1], [0], [0], [0, 0, 1, 0], [], []>} : vector<8x64xf32>, vector<256x64xf32>, vector<8x256xf32> -> vector<8x256xf32>
    %4 = tpu.iota {dimensions = array<i32: 0>} : vector<8x256xi32>
    %c8_i32 = arith.constant 8 : i32
    %5 = vector.broadcast %c8_i32 : i32 to vector<8x256xi32>
    %6 = arith.cmpi slt, %4, %5 : vector<8x256xi32>
    %cst_3 = arith.constant -1.000000e+30 : f32
    %7 = vector.broadcast %cst_3 : f32 to vector<8x256xf32>
    %8 = arith.select %6, %3, %7 : vector<8x256xi1>, vector<8x256xf32>
    %cst_4 = arith.constant dense<0xFF800000> : vector<256xf32>
    %9 = vector.multi_reduction <maximumf>, %8, %cst_4 [0] : vector<8x256xf32> to vector<256xf32>
    %10 = vector.shape_cast %9 : vector<256xf32> to vector<1x256xf32>
    %11 = vector.broadcast %10 : vector<1x256xf32> to vector<8x256xf32>
    %12 = arith.subf %8, %11 : vector<8x256xf32>
    %13 = math.exp %12 : vector<8x256xf32>
    %cst_5 = arith.constant dense<0.000000e+00> : vector<256xf32>
    %14 = vector.multi_reduction <add>, %13, %cst_5 [0] : vector<8x256xf32> to vector<256xf32>
    %15 = vector.shape_cast %14 : vector<256xf32> to vector<1x256xf32>
    %16 = tpu.reciprocal %15 {approx = true} : vector<1x256xf32> -> vector<1x256xf32>
    %17 = vector.broadcast %16 : vector<1x256xf32> to vector<8x256xf32>
    %18 = arith.mulf %13, %17 : vector<8x256xf32>
    %c0_6 = arith.constant 0 : index
    %c0_7 = arith.constant 0 : index
    %19 = vector.load %arg3[%c0_6, %c0_7] : memref<8x256xf32, #tpu.memory_space<vmem>>, vector<8x256xf32>
    tpu.vector_store %arg3[%c0_6, %c0_7], %18 {strides = array<i32>} : memref<8x256xf32, #tpu.memory_space<vmem>>, vector<8x256xf32>,
    return
  }
  func.func @transform_0(%arg0: i32) -> (i32, i32) {
    %c0_i32 = arith.constant 0 : i32
    %c0_i32_0 = arith.constant 0 : i32
    %c0_i32_1 = arith.constant 0 : i32
    return %c0_i32, %c0_i32_0 : i32, i32
  }
  func.func @transform_1(%arg0: i32) -> (i32, i32) {
    %c0_i32 = arith.constant 0 : i32
    %c0_i32_0 = arith.constant 0 : i32
    return %arg0, %c0_i32 : i32, i32
  }
  func.func @transform_2(%arg0: i32) -> (i32, i32) {
    %c0_i32 = arith.constant 0 : i32
    %c0_i32_0 = arith.constant 0 : i32
    return %c0_i32, %arg0 : i32, i32
  }
}

module attributes {stable_mosaic.version = 11 : i64} {
  func.func @_phase1_kernel(%arg0: i32, %arg1: memref<256x64xbf16, #tpu.memory_space<vmem>>, %arg2: memref<256x32xbf16, #tpu.memory_space<vmem>>, %arg3: memref<64x64xf32, #tpu.memory_space<vmem>>, %arg4: memref<32x32xf32, #tpu.memory_space<vmem>>, %arg5: memref<1x32xf32, #tpu.memory_space<vmem>>, %arg6: memref<1x32xf32, #tpu.memory_space<vmem>>, %arg7: memref<1x32xf32, #tpu.memory_space<vmem>>, %arg8: memref<32x64xf32, #tpu.memory_space<vmem>>, %arg9: memref<1x64xf32, #tpu.memory_space<vmem>>, %arg10: memref<1x64xf32, #tpu.memory_space<vmem>>, %arg11: memref<1x64xf32, #tpu.memory_space<vmem>>, %arg12: memref<64x8xf32, #tpu.memory_space<vmem>>, %arg13: memref<8x1xf32, #tpu.memory_space<vmem>>, %arg14: memref<8x64xf32, #tpu.memory_space<vmem>>, %arg15: memref<64x32xf32, #tpu.memory_space<vmem>>, %arg16: memref<64x32xf32, #tpu.memory_space<vmem>>) attributes {dimension_semantics = [#tpu.dimension_semantics<arbitrary>], iteration_bounds = array<i64: 1>, scalar_prefetch = 0 : i64, scratch_operands = 2 : i64, tpu.core_type = #tpu.core_type<tc>, window_params = [{transform_indices = @transform_0, window_bounds = array<i64: 256, 64>}, {transform_indices = @transform_1, window_bounds = array<i64: 256, 32>}, {pipeline_mode = #tpu.pipeline_mode<synchronous>, transform_indices = @transform_2, window_bounds = array<i64: 64, 64>}, {pipeline_mode = #tpu.pipeline_mode<synchronous>, transform_indices = @transform_3, window_bounds = array<i64: 32, 32>}, {pipeline_mode = #tpu.pipeline_mode<synchronous>, transform_indices = @transform_4, window_bounds = array<i64: 1, 32>}, {pipeline_mode = #tpu.pipeline_mode<synchronous>, transform_indices = @transform_5, window_bounds = array<i64: 1, 32>}, {pipeline_mode = #tpu.pipeline_mode<synchronous>, transform_indices = @transform_6, window_bounds = array<i64: 1, 32>}, {pipeline_mode = #tpu.pipeline_mode<synchronous>, transform_indices = @transform_7, window_bounds = array<i64: 32, 64>}, {pipeline_mode = #tpu.pipeline_mode<synchronous>, transform_indices = @transform_8, window_bounds = array<i64: 1, 64>}, {pipeline_mode = #tpu.pipeline_mode<synchronous>, transform_indices = @transform_9, window_bounds = array<i64: 1, 64>}, {pipeline_mode = #tpu.pipeline_mode<synchronous>, transform_indices = @transform_10, window_bounds = array<i64: 1, 64>}, {pipeline_mode = #tpu.pipeline_mode<synchronous>, transform_indices = @transform_11, window_bounds = array<i64: 64, 8>}, {pipeline_mode = #tpu.pipeline_mode<synchronous>, transform_indices = @transform_12, window_bounds = array<i64: 8, 1>}, {pipeline_mode = #tpu.pipeline_mode<synchronous>, transform_indices = @transform_13, window_bounds = array<i64: 8, 64>}]} {
    %c0_i32 = arith.constant 0 : i32
    %0 = arith.cmpi eq, %arg0, %c0_i32 : i32
    %1 = arith.extui %0 : i1 to i32
    %c0_i32_0 = arith.constant 0 : i32
    %2 = arith.cmpi ne, %1, %c0_i32_0 : i32
    scf.if %2 {
      %cst_16 = arith.constant 0.000000e+00 : f32
      %17 = vector.broadcast %cst_16 : f32 to vector<64x32xf32>
      %c0_17 = arith.constant 0 : index
      %c0_18 = arith.constant 0 : index
      %18 = vector.load %arg15[%c0_17, %c0_18] : memref<64x32xf32, #tpu.memory_space<vmem>>, vector<64x32xf32>
      tpu.vector_store %arg15[%c0_17, %c0_18], %17 {strides = array<i32>} : memref<64x32xf32, #tpu.memory_space<vmem>>, vector<64x32xf32>,
      %cst_19 = arith.constant 0.000000e+00 : f32
      %19 = vector.broadcast %cst_19 : f32 to vector<64x32xf32>
      %c0_20 = arith.constant 0 : index
      %c0_21 = arith.constant 0 : index
      %20 = vector.load %arg16[%c0_20, %c0_21] : memref<64x32xf32, #tpu.memory_space<vmem>>, vector<64x32xf32>
      tpu.vector_store %arg16[%c0_20, %c0_21], %19 {strides = array<i32>} : memref<64x32xf32, #tpu.memory_space<vmem>>, vector<64x32xf32>,
    } else {
    }
    %c0 = arith.constant 0 : index
    %c0_1 = arith.constant 0 : index
    %3 = vector.load %arg1[%c0, %c0_1] : memref<256x64xbf16, #tpu.memory_space<vmem>>, vector<256x64xbf16>
    %c0_2 = arith.constant 0 : index
    %c0_3 = arith.constant 0 : index
    %4 = vector.load %arg2[%c0_2, %c0_3] : memref<256x32xbf16, #tpu.memory_space<vmem>>, vector<256x32xbf16>
    %c0_4 = arith.constant 0 : index
    %c0_5 = arith.constant 0 : index
    %5 = vector.load %arg15[%c0_4, %c0_5] : memref<64x32xf32, #tpu.memory_space<vmem>>, vector<64x32xf32>
    %cst = arith.constant dense<0.000000e+00> : vector<64x32xf32>
    %6 = tpu.matmul %3, %4, %cst {dimension_numbers = #tpu.dot_dimension_numbers<[0], [0], [1], [1], [0, 1, 1, 1], [], []>} : vector<256x64xbf16>, vector<256x32xbf16>, vector<64x32xf32> -> vector<64x32xf32>
    %7 = arith.addf %5, %6 : vector<64x32xf32>
    %c0_6 = arith.constant 0 : index
    %c0_7 = arith.constant 0 : index
    %8 = vector.load %arg15[%c0_6, %c0_7] : memref<64x32xf32, #tpu.memory_space<vmem>>, vector<64x32xf32>
    tpu.vector_store %arg15[%c0_6, %c0_7], %7 {strides = array<i32>} : memref<64x32xf32, #tpu.memory_space<vmem>>, vector<64x32xf32>,
    %cst_8 = arith.constant 1.000000e+00 : bf16
    %9 = vector.broadcast %cst_8 : bf16 to vector<256x32xbf16>
    %c0_9 = arith.constant 0 : index
    %c0_10 = arith.constant 0 : index
    %10 = vector.load %arg16[%c0_9, %c0_10] : memref<64x32xf32, #tpu.memory_space<vmem>>, vector<64x32xf32>
    %cst_11 = arith.constant dense<0.000000e+00> : vector<64x32xf32>
    %11 = tpu.matmul %3, %9, %cst_11 {dimension_numbers = #tpu.dot_dimension_numbers<[0], [0], [1], [1], [0, 1, 1, 1], [], []>} : vector<256x64xbf16>, vector<256x32xbf16>, vector<64x32xf32> -> vector<64x32xf32>
    %12 = arith.addf %10, %11 : vector<64x32xf32>
    %c0_12 = arith.constant 0 : index
    %c0_13 = arith.constant 0 : index
    %13 = vector.load %arg16[%c0_12, %c0_13] : memref<64x32xf32, #tpu.memory_space<vmem>>, vector<64x32xf32>
    tpu.vector_store %arg16[%c0_12, %c0_13], %12 {strides = array<i32>} : memref<64x32xf32, #tpu.memory_space<vmem>>, vector<64x32xf32>,
    %c0_i32_14 = arith.constant 0 : i32
    %14 = arith.cmpi eq, %arg0, %c0_i32_14 : i32
    %15 = arith.extui %14 : i1 to i32
    %c0_i32_15 = arith.constant 0 : i32
    %16 = arith.cmpi ne, %15, %c0_i32_15 : i32
    scf.if %16 {
      %c0_16 = arith.constant 0 : index
      %c0_17 = arith.constant 0 : index
      %17 = vector.load %arg16[%c0_16, %c0_17] : memref<64x32xf32, #tpu.memory_space<vmem>>, vector<64x32xf32>
      %cst_18 = arith.constant 0.000000e+00 : f32
      %18 = vector.broadcast %cst_18 : f32 to vector<64x32xf32>
      %19 = arith.cmpf ogt, %17, %18 : vector<64x32xf32>
      %cst_19 = arith.constant 1.000000e+00 : f32
      %20 = vector.broadcast %cst_19 : f32 to vector<64x32xf32>
      %21 = arith.select %19, %17, %20 : vector<64x32xi1>, vector<64x32xf32>
      %c0_20 = arith.constant 0 : index
      %c0_21 = arith.constant 0 : index
      %22 = vector.load %arg15[%c0_20, %c0_21] : memref<64x32xf32, #tpu.memory_space<vmem>>, vector<64x32xf32>
      %cst_22 = arith.constant 1.000000e+00 : f32
      %23 = vector.broadcast %cst_22 : f32 to vector<64x32xf32>
      %24 = arith.divf %23, %21 : vector<64x32xf32>
      %25 = arith.mulf %22, %24 : vector<64x32xf32>
      %c0_23 = arith.constant 0 : index
      %c0_24 = arith.constant 0 : index
      %26 = vector.load %arg3[%c0_23, %c0_24] : memref<64x64xf32, #tpu.memory_space<vmem>>, vector<64x64xf32>
      %c0_25 = arith.constant 0 : index
      %c0_26 = arith.constant 0 : index
      %27 = vector.load %arg4[%c0_25, %c0_26] : memref<32x32xf32, #tpu.memory_space<vmem>>, vector<32x32xf32>
      %cst_27 = arith.constant dense<0.000000e+00> : vector<64x32xf32>
      %28 = tpu.matmul %25, %27, %cst_27 {dimension_numbers = #tpu.dot_dimension_numbers<[1], [0], [0], [1], [0, 0, 1, 1], [], []>} : vector<64x32xf32>, vector<32x32xf32>, vector<64x32xf32> -> vector<64x32xf32>
      %c0_28 = arith.constant 0 : index
      %c0_29 = arith.constant 0 : index
      %29 = vector.load %arg5[%c0_28, %c0_29] : memref<1x32xf32, #tpu.memory_space<vmem>>, vector<1x32xf32>
      %30 = vector.broadcast %29 : vector<1x32xf32> to vector<64x32xf32>
      %31 = arith.addf %28, %30 : vector<64x32xf32>
      %cst_30 = arith.constant dense<0.000000e+00> : vector<64x32xf32>
      %32 = tpu.matmul %26, %31, %cst_30 {dimension_numbers = #tpu.dot_dimension_numbers<[1], [0], [0], [1], [0, 0, 1, 1], [], []>} : vector<64x64xf32>, vector<64x32xf32>, vector<64x32xf32> -> vector<64x32xf32>
      %c0_31 = arith.constant 0 : index
      %c0_32 = arith.constant 0 : index
      %33 = vector.load %arg6[%c0_31, %c0_32] : memref<1x32xf32, #tpu.memory_space<vmem>>, vector<1x32xf32>
      %c0_33 = arith.constant 0 : index
      %c0_34 = arith.constant 0 : index
      %34 = vector.load %arg7[%c0_33, %c0_34] : memref<1x32xf32, #tpu.memory_space<vmem>>, vector<1x32xf32>
      %cst_35 = arith.constant dense<0.000000e+00> : vector<32xf32>
      %35 = vector.multi_reduction <add>, %32, %cst_35 [0] : vector<64x32xf32> to vector<32xf32>
      %36 = vector.shape_cast %35 : vector<32xf32> to vector<1x32xf32>
      %37 = arith.mulf %32, %32 : vector<64x32xf32>
      %cst_36 = arith.constant dense<0.000000e+00> : vector<32xf32>
      %38 = vector.multi_reduction <add>, %37, %cst_36 [0] : vector<64x32xf32> to vector<32xf32>
      %39 = vector.shape_cast %38 : vector<32xf32> to vector<1x32xf32>
      %cst_37 = arith.constant 1.562500e-02 : f32
      %40 = vector.broadcast %cst_37 : f32 to vector<1x32xf32>
      %41 = arith.mulf %36, %40 : vector<1x32xf32>
      %cst_38 = arith.constant 1.562500e-02 : f32
      %42 = vector.broadcast %cst_38 : f32 to vector<1x32xf32>
      %43 = arith.mulf %39, %42 : vector<1x32xf32>
      %44 = arith.mulf %41, %41 : vector<1x32xf32>
      %45 = arith.subf %43, %44 : vector<1x32xf32>
      %cst_39 = arith.constant 0.000000e+00 : f32
      %46 = vector.broadcast %cst_39 : f32 to vector<1x32xf32>
      %47 = arith.maximumf %45, %46 : vector<1x32xf32>
      %48 = vector.broadcast %41 : vector<1x32xf32> to vector<64x32xf32>
      %49 = arith.subf %32, %48 : vector<64x32xf32>
      %cst_40 = arith.constant 9.99999974E-6 : f32
      %50 = vector.broadcast %cst_40 : f32 to vector<1x32xf32>
      %51 = arith.addf %47, %50 : vector<1x32xf32>
      %52 = math.rsqrt %51 : vector<1x32xf32>
      %53 = vector.broadcast %52 : vector<1x32xf32> to vector<64x32xf32>
      %54 = arith.mulf %49, %53 : vector<64x32xf32>
      %55 = vector.broadcast %33 : vector<1x32xf32> to vector<64x32xf32>
      %56 = arith.mulf %54, %55 : vector<64x32xf32>
      %57 = vector.broadcast %34 : vector<1x32xf32> to vector<64x32xf32>
      %58 = arith.addf %56, %57 : vector<64x32xf32>
      %cst_41 = arith.constant 0.000000e+00 : f32
      %59 = vector.broadcast %cst_41 : f32 to vector<64x32xf32>
      %60 = arith.maximumf %58, %59 : vector<64x32xf32>
      %c0_42 = arith.constant 0 : index
      %c0_43 = arith.constant 0 : index
      %61 = vector.load %arg8[%c0_42, %c0_43] : memref<32x64xf32, #tpu.memory_space<vmem>>, vector<32x64xf32>
      %cst_44 = arith.constant dense<0.000000e+00> : vector<64x64xf32>
      %62 = tpu.matmul %60, %61, %cst_44 {dimension_numbers = #tpu.dot_dimension_numbers<[1], [0], [0], [1], [0, 0, 1, 1], [], []>} : vector<64x32xf32>, vector<32x64xf32>, vector<64x64xf32> -> vector<64x64xf32>
      %c0_45 = arith.constant 0 : index
      %c0_46 = arith.constant 0 : index
      %63 = vector.load %arg9[%c0_45, %c0_46] : memref<1x64xf32, #tpu.memory_space<vmem>>, vector<1x64xf32>
      %64 = vector.broadcast %63 : vector<1x64xf32> to vector<64x64xf32>
      %65 = arith.addf %62, %64 : vector<64x64xf32>
      %cst_47 = arith.constant dense<0.000000e+00> : vector<64x64xf32>
      %66 = tpu.matmul %26, %65, %cst_47 {dimension_numbers = #tpu.dot_dimension_numbers<[1], [0], [0], [1], [0, 0, 1, 1], [], []>} : vector<64x64xf32>, vector<64x64xf32>, vector<64x64xf32> -> vector<64x64xf32>
      %c0_48 = arith.constant 0 : index
      %c0_49 = arith.constant 0 : index
      %67 = vector.load %arg10[%c0_48, %c0_49] : memref<1x64xf32, #tpu.memory_space<vmem>>, vector<1x64xf32>
      %c0_50 = arith.constant 0 : index
      %c0_51 = arith.constant 0 : index
      %68 = vector.load %arg11[%c0_50, %c0_51] : memref<1x64xf32, #tpu.memory_space<vmem>>, vector<1x64xf32>
      %cst_52 = arith.constant dense<0.000000e+00> : vector<64xf32>
      %69 = vector.multi_reduction <add>, %66, %cst_52 [0] : vector<64x64xf32> to vector<64xf32>
      %70 = vector.shape_cast %69 : vector<64xf32> to vector<1x64xf32>
      %71 = arith.mulf %66, %66 : vector<64x64xf32>
      %cst_53 = arith.constant dense<0.000000e+00> : vector<64xf32>
      %72 = vector.multi_reduction <add>, %71, %cst_53 [0] : vector<64x64xf32> to vector<64xf32>
      %73 = vector.shape_cast %72 : vector<64xf32> to vector<1x64xf32>
      %cst_54 = arith.constant 1.562500e-02 : f32
      %74 = vector.broadcast %cst_54 : f32 to vector<1x64xf32>
      %75 = arith.mulf %70, %74 : vector<1x64xf32>
      %cst_55 = arith.constant 1.562500e-02 : f32
      %76 = vector.broadcast %cst_55 : f32 to vector<1x64xf32>
      %77 = arith.mulf %73, %76 : vector<1x64xf32>
      %78 = arith.mulf %75, %75 : vector<1x64xf32>
      %79 = arith.subf %77, %78 : vector<1x64xf32>
      %cst_56 = arith.constant 0.000000e+00 : f32
      %80 = vector.broadcast %cst_56 : f32 to vector<1x64xf32>
      %81 = arith.maximumf %79, %80 : vector<1x64xf32>
      %82 = vector.broadcast %75 : vector<1x64xf32> to vector<64x64xf32>
      %83 = arith.subf %66, %82 : vector<64x64xf32>
      %cst_57 = arith.constant 9.99999974E-6 : f32
      %84 = vector.broadcast %cst_57 : f32 to vector<1x64xf32>
      %85 = arith.addf %81, %84 : vector<1x64xf32>
      %86 = math.rsqrt %85 : vector<1x64xf32>
      %87 = vector.broadcast %86 : vector<1x64xf32> to vector<64x64xf32>
      %88 = arith.mulf %83, %87 : vector<64x64xf32>
      %89 = vector.broadcast %67 : vector<1x64xf32> to vector<64x64xf32>
      %90 = arith.mulf %88, %89 : vector<64x64xf32>
      %91 = vector.broadcast %68 : vector<1x64xf32> to vector<64x64xf32>
      %92 = arith.addf %90, %91 : vector<64x64xf32>
      %cst_58 = arith.constant 0.000000e+00 : f32
      %93 = vector.broadcast %cst_58 : f32 to vector<64x64xf32>
      %94 = arith.maximumf %92, %93 : vector<64x64xf32>
      %c0_59 = arith.constant 0 : index
      %c0_60 = arith.constant 0 : index
      %95 = vector.load %arg12[%c0_59, %c0_60] : memref<64x8xf32, #tpu.memory_space<vmem>>, vector<64x8xf32>
      %cst_61 = arith.constant dense<0.000000e+00> : vector<8x64xf32>
      %96 = tpu.matmul %95, %94, %cst_61 {dimension_numbers = #tpu.dot_dimension_numbers<[0], [1], [1], [0], [0, 1, 1, 0], [], []>} : vector<64x8xf32>, vector<64x64xf32>, vector<8x64xf32> -> vector<8x64xf32>
      %c0_62 = arith.constant 0 : index
      %c0_63 = arith.constant 0 : index
      %97 = vector.load %arg13[%c0_62, %c0_63] : memref<8x1xf32, #tpu.memory_space<vmem>>, vector<8x1xf32>
      %98 = vector.broadcast %97 : vector<8x1xf32> to vector<8x64xf32>
      %99 = arith.addf %96, %98 : vector<8x64xf32>
      %c0_64 = arith.constant 0 : index
      %c0_65 = arith.constant 0 : index
      %100 = vector.load %arg14[%c0_64, %c0_65] : memref<8x64xf32, #tpu.memory_space<vmem>>, vector<8x64xf32>
      tpu.vector_store %arg14[%c0_64, %c0_65], %99 {strides = array<i32>} : memref<8x64xf32, #tpu.memory_space<vmem>>, vector<8x64xf32>,
    } else {
    }
    return
  }
  func.func @transform_0(%arg0: i32) -> (i32, i32) {
    %c0_i32 = arith.constant 0 : i32
    %c0_i32_0 = arith.constant 0 : i32
    return %arg0, %c0_i32 : i32, i32
  }
  func.func @transform_1(%arg0: i32) -> (i32, i32) {
    %c0_i32 = arith.constant 0 : i32
    %c0_i32_0 = arith.constant 0 : i32
    return %arg0, %c0_i32 : i32, i32
  }
  func.func @transform_2(%arg0: i32) -> (i32, i32) {
    %c0_i32 = arith.constant 0 : i32
    %c0_i32_0 = arith.constant 0 : i32
    %c0_i32_1 = arith.constant 0 : i32
    return %c0_i32, %c0_i32_0 : i32, i32
  }
  func.func @transform_3(%arg0: i32) -> (i32, i32) {
    %c0_i32 = arith.constant 0 : i32
    %c0_i32_0 = arith.constant 0 : i32
    %c0_i32_1 = arith.constant 0 : i32
    return %c0_i32, %c0_i32_0 : i32, i32
  }
  func.func @transform_4(%arg0: i32) -> (i32, i32) {
    %c0_i32 = arith.constant 0 : i32
    %c0_i32_0 = arith.constant 0 : i32
    %c0_i32_1 = arith.constant 0 : i32
    return %c0_i32, %c0_i32_0 : i32, i32
  }
  func.func @transform_5(%arg0: i32) -> (i32, i32) {
    %c0_i32 = arith.constant 0 : i32
    %c0_i32_0 = arith.constant 0 : i32
    %c0_i32_1 = arith.constant 0 : i32
    return %c0_i32, %c0_i32_0 : i32, i32
  }
  func.func @transform_6(%arg0: i32) -> (i32, i32) {
    %c0_i32 = arith.constant 0 : i32
    %c0_i32_0 = arith.constant 0 : i32
    %c0_i32_1 = arith.constant 0 : i32
    return %c0_i32, %c0_i32_0 : i32, i32
  }
  func.func @transform_7(%arg0: i32) -> (i32, i32) {
    %c0_i32 = arith.constant 0 : i32
    %c0_i32_0 = arith.constant 0 : i32
    %c0_i32_1 = arith.constant 0 : i32
    return %c0_i32, %c0_i32_0 : i32, i32
  }
  func.func @transform_8(%arg0: i32) -> (i32, i32) {
    %c0_i32 = arith.constant 0 : i32
    %c0_i32_0 = arith.constant 0 : i32
    %c0_i32_1 = arith.constant 0 : i32
    return %c0_i32, %c0_i32_0 : i32, i32
  }
  func.func @transform_9(%arg0: i32) -> (i32, i32) {
    %c0_i32 = arith.constant 0 : i32
    %c0_i32_0 = arith.constant 0 : i32
    %c0_i32_1 = arith.constant 0 : i32
    return %c0_i32, %c0_i32_0 : i32, i32
  }
  func.func @transform_10(%arg0: i32) -> (i32, i32) {
    %c0_i32 = arith.constant 0 : i32
    %c0_i32_0 = arith.constant 0 : i32
    %c0_i32_1 = arith.constant 0 : i32
    return %c0_i32, %c0_i32_0 : i32, i32
  }
  func.func @transform_11(%arg0: i32) -> (i32, i32) {
    %c0_i32 = arith.constant 0 : i32
    %c0_i32_0 = arith.constant 0 : i32
    %c0_i32_1 = arith.constant 0 : i32
    return %c0_i32, %c0_i32_0 : i32, i32
  }
  func.func @transform_12(%arg0: i32) -> (i32, i32) {
    %c0_i32 = arith.constant 0 : i32
    %c0_i32_0 = arith.constant 0 : i32
    %c0_i32_1 = arith.constant 0 : i32
    return %c0_i32, %c0_i32_0 : i32, i32
  }
  func.func @transform_13(%arg0: i32) -> (i32, i32) {
    %c0_i32 = arith.constant 0 : i32
    %c0_i32_0 = arith.constant 0 : i32
    %c0_i32_1 = arith.constant 0 : i32
    return %c0_i32, %c0_i32_0 : i32, i32
  }
}

</mosaic_0001>

<llo_original>
// kernel: hgcn_forward.3
$region0: #{hgcn_forward.3}
  #allocation0 [shape = 'u32[]', space=smem, size = 0x4, offset = 0x4, fixed_abs, tag = 'smem constant byte address 0x4 - core index']
  #allocation1 [shape = 'u32[144,128]{1,0:T(1,128)}', space=vmem, size = 0x12000, scoped, tag = 'internal scratch']
  %s0 = inlined_call_operand.vmem [shape: f32[8,64], index: 0, kind: input, shape index: {}]
  %s1 = inlined_call_operand.vmem [shape: bf16[256,64], index: 1, kind: input, shape index: {}]
  %s2 = inlined_call_operand.hbm [shape: f32[8,256], index: 2, kind: output, shape index: {}]
  %s3 = sld [smem:[#allocation0]]
  $region18: #{hgcn_forward.3} parent=0
    _
  %s5 = ssub.s32 1, %s3
  %s6 = scalar_select 0, %s5, %s3
  $region1: #{hgcn_forward.3} parent=0
    #allocation2 [shape = 'u8[8192]{0}', space=vmem, size = 0x2000, scoped, tag = 'output window, operand 0, single buffered']
    #allocation3 [shape = 's32[1]{0}', space=sflag, size = 0x4, scoped, tag = 'scoped memory for hgcn_forward.3']
    %7 = vsyncpa [#allocation3], 0
    // Predicated region
    $region2: #{hgcn_forward.3} parent=1 // pred_check
      _
    $region3: #{hgcn_forward.3} parent=1 // pred_check_branch
      %9 = sbr.rel (0) target = $region5
    $region4: #{hgcn_forward.3} parent=1 // pred_region
      _
    $region5: #{hgcn_forward.3} parent=1 // pred_fallthru
      _
    // Predicated region
    $region6: #{hgcn_forward.3} parent=1 // pred_check
      _
    $region7: #{hgcn_forward.3} parent=1 // pred_check_branch
      %11 = sbr.rel (0) target = $region9
    $region8: #{hgcn_forward.3} parent=1 // pred_region
      _
    $region9: #{hgcn_forward.3} parent=1 // pred_fallthru
      _
    %v12 = vld [vmem:[%s1] sm:$0xf]
    %v13 = vld [vmem:[%s1 + $0x4] sm:$0xf]
    %v14 = vld [vmem:[%s1 + $0x8] sm:$0xf]
    %v15 = vld [vmem:[%s1 + $0xc] sm:$0xf]
    %v16 = vld [vmem:[%s1 + $0x10] sm:$0xf]
    %v17 = vld [vmem:[%s1 + $0x14] sm:$0xf]
    %v18 = vld [vmem:[%s1 + $0x18] sm:$0xf]
    %v19 = vld [vmem:[%s1 + $0x1c] sm:$0xf]
    %v20 = vld [vmem:[%s1 + $0x20] sm:$0xf]
    %v21 = vld [vmem:[%s1 + $0x24] sm:$0xf]
    %v22 = vld [vmem:[%s1 + $0x28] sm:$0xf]
    %v23 = vld [vmem:[%s1 + $0x2c] sm:$0xf]
    %v24 = vld [vmem:[%s1 + $0x30] sm:$0xf]
    %v25 = vld [vmem:[%s1 + $0x34] sm:$0xf]
    %v26 = vld [vmem:[%s1 + $0x38] sm:$0xf]
    %v27 = vld [vmem:[%s1 + $0x3c] sm:$0xf]
    %v28 = vld [vmem:[%s1 + $0x40] sm:$0xf]
    %v29 = vld [vmem:[%s1 + $0x44] sm:$0xf]
    %v30 = vld [vmem:[%s1 + $0x48] sm:$0xf]
    %v31 = vld [vmem:[%s1 + $0x4c] sm:$0xf]
    %v32 = vld [vmem:[%s1 + $0x50] sm:$0xf]
    %v33 = vld [vmem:[%s1 + $0x54] sm:$0xf]
    %v34 = vld [vmem:[%s1 + $0x58] sm:$0xf]
    %v35 = vld [vmem:[%s1 + $0x5c] sm:$0xf]
    %v36 = vld [vmem:[%s1 + $0x60] sm:$0xf]
    %v37 = vld [vmem:[%s1 + $0x64] sm:$0xf]
    %v38 = vld [vmem:[%s1 + $0x68] sm:$0xf]
    %v39 = vld [vmem:[%s1 + $0x6c] sm:$0xf]
    %v40 = vld [vmem:[%s1 + $0x70] sm:$0xf]
    %v41 = vld [vmem:[%s1 + $0x74] sm:$0xf]
    %v42 = vld [vmem:[%s1 + $0x78] sm:$0xf]
    %v43 = vld [vmem:[%s1 + $0x7c] sm:$0xf]
    %v44 = vunpack.c.l.bf16 %v12
    %v45 = vunpack.c.l.bf16 %v13
    %v46 = vunpack.c.l.bf16 %v14
    %v47 = vunpack.c.l.bf16 %v15
    %v48 = vunpack.c.l.bf16 %v16
    %v49 = vunpack.c.l.bf16 %v17
    %v50 = vunpack.c.l.bf16 %v18
    %v51 = vunpack.c.l.bf16 %v19
    %v52 = vunpack.c.l.bf16 %v20
    %v53 = vunpack.c.l.bf16 %v21
    %v54 = vunpack.c.l.bf16 %v22
    %v55 = vunpack.c.l.bf16 %v23
    %v56 = vunpack.c.l.bf16 %v24
    %v57 = vunpack.c.l.bf16 %v25
    %v58 = vunpack.c.l.bf16 %v26
    %v59 = vunpack.c.l.bf16 %v27
    %v60 = vunpack.c.l.bf16 %v28
    %v61 = vunpack.c.l.bf16 %v29
    %v62 = vunpack.c.l.bf16 %v30
    %v63 = vunpack.c.l.bf16 %v31
    %v64 = vunpack.c.l.bf16 %v32
    %v65 = vunpack.c.l.bf16 %v33
    %v66 = vunpack.c.l.bf16 %v34
    %v67 = vunpack.c.l.bf16 %v35
    %v68 = vunpack.c.l.bf16 %v36
    %v69 = vunpack.c.l.bf16 %v37
    %v70 = vunpack.c.l.bf16 %v38
    %v71 = vunpack.c.l.bf16 %v39
    %v72 = vunpack.c.l.bf16 %v40
    %v73 = vunpack.c.l.bf16 %v41
    %v74 = vunpack.c.l.bf16 %v42
    %v75 = vunpack.c.l.bf16 %v43
    %v76 = vld [vmem:[%s0] sm:$0xff]
    %vm77 = vcmask 523264
    %v79 = vsel %vm77, %v76, 0
    %v82 = vsel %vm77, %v44, 0
    %v85 = vsel %vm77, %v45, 0
    %v88 = vsel %vm77, %v46, 0
    %v91 = vsel %vm77, %v47, 0
    %v94 = vsel %vm77, %v48, 0
    %v97 = vsel %vm77, %v49, 0
    %v100 = vsel %vm77, %v50, 0
    %v103 = vsel %vm77, %v51, 0
    %v106 = vsel %vm77, %v52, 0
    %v109 = vsel %vm77, %v53, 0
    %v112 = vsel %vm77, %v54, 0
    %v115 = vsel %vm77, %v55, 0
    %v118 = vsel %vm77, %v56, 0
    %v121 = vsel %vm77, %v57, 0
    %v124 = vsel %vm77, %v58, 0
    %v127 = vsel %vm77, %v59, 0
    %v130 = vsel %vm77, %v60, 0
    %v133 = vsel %vm77, %v61, 0
    %v136 = vsel %vm77, %v62, 0
    %v139 = vsel %vm77, %v63, 0
    %v142 = vsel %vm77, %v64, 0
    %v145 = vsel %vm77, %v65, 0
    %v148 = vsel %vm77, %v66, 0
    %v151 = vsel %vm77, %v67, 0
    %v154 = vsel %vm77, %v68, 0
    %v157 = vsel %vm77, %v69, 0
    %v160 = vsel %vm77, %v70, 0
    %v163 = vsel %vm77, %v71, 0
    %v166 = vsel %vm77, %v72, 0
    %v169 = vsel %vm77, %v73, 0
    %v172 = vsel %vm77, %v74, 0
    %v175 = vsel %vm77, %v75, 0
    %177 = vmatprep.subr.mxu0 0.0
    %178 = vmatpush1.xpose.msra.mxu0 %v82
    %179 = vmatprep.subr.mxu0 0.0
    %180 = vmatpush1.xpose.msra.mxu0 %v85
    %181 = vmatprep.subr.mxu0 0.0
    %182 = vmatpush1.xpose.msra.mxu0 %v88
    %183 = vmatprep.subr.mxu0 0.0
    %184 = vmatpush1.xpose.msra.mxu0 %v91
    %185 = vmatprep.subr.mxu0 0.0
    %186 = vmatpush1.xpose.msra.mxu0 %v94
    %187 = vmatprep.subr.mxu0 0.0
    %188 = vmatpush1.xpose.msra.mxu0 %v97
    %189 = vmatprep.subr.mxu0 0.0
    %190 = vmatpush1.xpose.msra.mxu0 %v100
    %191 = vmatprep.subr.mxu0 0.0
    %192 = vmatpush1.xpose.msra.mxu0 %v103
    %193 = vmatprep.subr.mxu0 0.0
    %194 = vmatpush1.xpose.msra.mxu0 %v106
    %195 = vmatprep.subr.mxu0 0.0
    %196 = vmatpush1.xpose.msra.mxu0 %v109
    %197 = vmatprep.subr.mxu0 0.0
    %198 = vmatpush1.xpose.msra.mxu0 %v112
    %199 = vmatprep.subr.mxu0 0.0
    %200 = vmatpush1.xpose.msra.mxu0 %v115
    %201 = vmatprep.subr.mxu0 0.0
    %202 = vmatpush1.xpose.msra.mxu0 %v118
    %203 = vmatprep.subr.mxu0 0.0
    %204 = vmatpush1.xpose.msra.mxu0 %v121
    %205 = vmatprep.subr.mxu0 0.0
    %206 = vmatpush1.xpose.msra.mxu0 %v124
    %207 = vmatprep.subr.mxu0 0.0
    %208 = vmatpush1.xpose.msra.mxu0 %v127
    %209 = vmatprep.subr.mxu0 0.0
    %210 = vmatpush1.xpose.msra.mxu0 %v130
    %211 = vmatprep.subr.mxu0 0.0
    %212 = vmatpush1.xpose.msra.mxu0 %v133
    %213 = vmatprep.subr.mxu0 0.0
    %214 = vmatpush1.xpose.msra.mxu0 %v136
    %215 = vmatprep.subr.mxu0 0.0
    %216 = vmatpush1.xpose.msra.mxu0 %v139
    %217 = vmatprep.subr.mxu0 0.0
    %218 = vmatpush1.xpose.msra.mxu0 %v142
    %219 = vmatprep.subr.mxu0 0.0
    %220 = vmatpush1.xpose.msra.mxu0 %v145
    %221 = vmatprep.subr.mxu0 0.0
    %222 = vmatpush1.xpose.msra.mxu0 %v148
    %223 = vmatprep.subr.mxu0 0.0
    %224 = vmatpush1.xpose.msra.mxu0 %v151
    %225 = vmatprep.subr.mxu0 0.0
    %226 = vmatpush1.xpose.msra.mxu0 %v154
    %227 = vmatprep.subr.mxu0 0.0
    %228 = vmatpush1.xpose.msra.mxu0 %v157
    %229 = vmatprep.subr.mxu0 0.0
    %230 = vmatpush1.xpose.msra.mxu0 %v160
    %231 = vmatprep.subr.mxu0 0.0
    %232 = vmatpush1.xpose.msra.mxu0 %v163
    %233 = vmatprep.subr.mxu0 0.0
    %234 = vmatpush1.xpose.msra.mxu0 %v166
    %235 = vmatprep.subr.mxu0 0.0
    %236 = vmatpush1.xpose.msra.mxu0 %v169
    %237 = vmatprep.subr.mxu0 0.0
    %238 = vmatpush1.xpose.msra.mxu0 %v172
    %239 = vmatprep.subr.mxu0 0.0
    %240 = vmatpush1.xpose.msra.mxu0 %v175
    %241 = vmatprep.mubr.f32.mxu0 0.0
    %242 = vmatmul.mubr.f32.gmra.mrb[0].mxu0 %v79
    %v243 = vpop.f32.mrb[0].mxu0
    %v244 = vadd.f32 0.0, %v243
    %v245 = vpop.f32.mrb[0].mxu0
    %v246 = vadd.f32 0.0, %v245
    %247 = vdwg.mxu0
    %v248 = vlaneseq
    %v249 = vshrl.u32 %v248, 7
    %vm250 = vcmp.lt.s32.totalorder %v249, 8
    %v251 = vsel %vm250, %v244, -1e+30
    %v252 = vsel %vm250, %v246, -1e+30
    %v253 = vrot.slane %v251, 4
    %v254 = vmax.f32 %v251, %v253
    %v255 = vrot.slane %v254, 2
    %v256 = vmax.f32 %v254, %v255
    %v257 = vrot.slane %v256, 1
    %v258 = vmax.f32 %v256, %v257
    %v259 = vrot.slane %v252, 4
    %v260 = vmax.f32 %v252, %v259
    %v261 = vrot.slane %v260, 2
    %v262 = vmax.f32 %v260, %v261
    %v263 = vrot.slane %v262, 1
    %v264 = vmax.f32 %v262, %v263
    %v265 = vsub.f32 %v251, %v258
    %v266 = vsub.f32 %v252, %v264
    %v267 = vmul.f32 %v265, 1.442695
    %v268 = vpow.pop %v267
    %v269 = vmul.f32 %v266, 1.442695
    %v270 = vpow.pop %v269
    %v271 = vrot.slane %v268, 4
    %v272 = vadd.f32 %v268, %v271
    %v273 = vrot.slane %v272, 2
    %v274 = vadd.f32 %v272, %v273
    %v275 = vrot.slane %v274, 1
    %v276 = vadd.f32 %v274, %v275
    %v277 = vrot.slane %v270, 4
    %v278 = vadd.f32 %v270, %v277
    %v279 = vrot.slane %v278, 2
    %v280 = vadd.f32 %v278, %v279
    %v281 = vrot.slane %v280, 1
    %v282 = vadd.f32 %v280, %v281
    %v283 = vrcp.pop %v276
    %v284 = vrcp.pop %v282
    %v285 = vmul.f32 %v268, %v283
    %v286 = vmul.f32 %v270, %v284
    %287 = vst [vmem:[#allocation2] sm:$0xff] %v285
    %288 = vst [vmem:[#allocation2 + $0x8] sm:$0xff] %v286
    // Predicated region
    $region10: #{hgcn_forward.3} parent=1 // pred_check
      _
    $region11: #{hgcn_forward.3} parent=1 // pred_check_branch
      %290 = sbr.rel (0) target = $region13
    $region12: #{hgcn_forward.3} parent=1 // pred_region
      %s292 = ssub.s32 256, 256
      %293 = vsyncadd [#allocation3], %s292
      %s295 = sshll.u32 [#allocation2], 4
      %s296 = int_to_ptr.vmem [resolvable:$true] %s295
      %298 = dma.vmem_to_hbm [thread:$0]  %s296, 256, %s2, [#allocation3]
    $region13: #{hgcn_forward.3} parent=1 // pred_fallthru
      _
    // Predicated region
    $region14: #{hgcn_forward.3} parent=1 // pred_check
      _
    $region15: #{hgcn_forward.3} parent=1 // pred_check_branch
      %300 = sbr.rel (0) target = $region17
    $region16: #{hgcn_forward.3} parent=1 // pred_region
      %301 = dma.done [#allocation3], 256
    $region17: #{hgcn_forward.3} parent=1 // pred_fallthru
      _
    %302 = vsyncpa [#allocation3], 1

// kernel: hgcn_forward.2
$region0: #{hgcn_forward.2}
  #allocation0 [shape = 'u32[]', space=smem, size = 0x4, offset = 0x4, fixed_abs, tag = 'smem constant byte address 0x4 - core index']
  #allocation1 [shape = 'u32[144,128]{1,0:T(1,128)}', space=vmem, size = 0x12000, scoped, tag = 'internal scratch']
  #allocation2 [shape = 'f32[64,32]{1,0:T(8,128)}', space=vmem, size = 0x8000, scoped, tag = 'scratch operand']
  #allocation3 [shape = 'f32[64,32]{1,0:T(8,128)}', space=vmem, size = 0x8000, scoped, tag = 'scratch operand']
  %s0 = inlined_call_operand.vmem [shape: bf16[256,64], index: 0, kind: input, shape index: {}]
  %s1 = inlined_call_operand.vmem [shape: bf16[256,32], index: 1, kind: input, shape index: {}]
  %s2 = inlined_call_operand.vmem [shape: f32[64,64], index: 2, kind: input, shape index: {}]
  %s3 = inlined_call_operand.vmem [shape: f32[32,32], index: 3, kind: input, shape index: {}]
  %s4 = inlined_call_operand.vmem [shape: f32[1,32], index: 4, kind: input, shape index: {}]
  %s5 = inlined_call_operand.vmem [shape: f32[1,32], index: 5, kind: input, shape index: {}]
  %s6 = inlined_call_operand.vmem [shape: f32[1,32], index: 6, kind: input, shape index: {}]
  %s7 = inlined_call_operand.vmem [shape: f32[32,64], index: 7, kind: input, shape index: {}]
  %s8 = inlined_call_operand.vmem [shape: f32[1,64], index: 8, kind: input, shape index: {}]
  %s9 = inlined_call_operand.vmem [shape: f32[1,64], index: 9, kind: input, shape index: {}]
  %s10 = inlined_call_operand.vmem [shape: f32[1,64], index: 10, kind: input, shape index: {}]
  %s11 = inlined_call_operand.vmem [shape: f32[64,8], index: 11, kind: input, shape index: {}]
  %s12 = inlined_call_operand.vmem [shape: f32[8,1], index: 12, kind: input, shape index: {}]
  %s13 = inlined_call_operand.vmem [shape: f32[8,64], index: 13, kind: output, shape index: {}]
  %s14 = sld [smem:[#allocation0]]
  $region70: #{hgcn_forward.2} parent=0
    _
  %s16 = ssub.s32 1, %s14
  %s17 = scalar_select 0, %s16, %s14
  // Predicated region
  $region2: #{hgcn_forward.2} parent=0 // pred_check
    _
  $region3: #{hgcn_forward.2} parent=0 // pred_check_branch
    %19 = sbr.rel (0) target = $region5
  $region4: #{hgcn_forward.2} parent=0 // pred_region
    _
  $region5: #{hgcn_forward.2} parent=0 // pred_fallthru
    _
  // Predicated region
  $region6: #{hgcn_forward.2} parent=0 // pred_check
    _
  $region7: #{hgcn_forward.2} parent=0 // pred_check_branch
    %21 = sbr.rel (0) target = $region9
  $region8: #{hgcn_forward.2} parent=0 // pred_region
    _
  $region9: #{hgcn_forward.2} parent=0 // pred_fallthru
    _
  // Predicated region
  $region10: #{hgcn_forward.2} parent=0 // pred_check
    _
  $region11: #{hgcn_forward.2} parent=0 // pred_check_branch
    %23 = sbr.rel (0) target = $region13
  $region12: #{hgcn_forward.2} parent=0 // pred_region
    _
  $region13: #{hgcn_forward.2} parent=0 // pred_fallthru
    _
  // Predicated region
  $region14: #{hgcn_forward.2} parent=0 // pred_check
    _
  $region15: #{hgcn_forward.2} parent=0 // pred_check_branch
    %25 = sbr.rel (0) target = $region17
  $region16: #{hgcn_forward.2} parent=0 // pred_region
    _
  $region17: #{hgcn_forward.2} parent=0 // pred_fallthru
    _
  // Predicated region
  $region18: #{hgcn_forward.2} parent=0 // pred_check
    _
  $region19: #{hgcn_forward.2} parent=0 // pred_check_branch
    %27 = sbr.rel (0) target = $region21
  $region20: #{hgcn_forward.2} parent=0 // pred_region
    _
  $region21: #{hgcn_forward.2} parent=0 // pred_fallthru
    _
  // Predicated region
  $region22: #{hgcn_forward.2} parent=0 // pred_check
    _
  $region23: #{hgcn_forward.2} parent=0 // pred_check_branch
    %29 = sbr.rel (0) target = $region25
  $region24: #{hgcn_forward.2} parent=0 // pred_region
    _
  $region25: #{hgcn_forward.2} parent=0 // pred_fallthru
    _
  // Predicated region
  $region26: #{hgcn_forward.2} parent=0 // pred_check
    _
  $region27: #{hgcn_forward.2} parent=0 // pred_check_branch
    %31 = sbr.rel (0) target = $region29
  $region28: #{hgcn_forward.2} parent=0 // pred_region
    _
  $region29: #{hgcn_forward.2} parent=0 // pred_fallthru
    _
  // Predicated region
  $region30: #{hgcn_forward.2} parent=0 // pred_check
    _
  $region31: #{hgcn_forward.2} parent=0 // pred_check_branch
    %33 = sbr.rel (0) target = $region33
  $region32: #{hgcn_forward.2} parent=0 // pred_region
    _
  $region33: #{hgcn_forward.2} parent=0 // pred_fallthru
    _
  // Predicated region
  $region34: #{hgcn_forward.2} parent=0 // pred_check
    _
  $region35: #{hgcn_forward.2} parent=0 // pred_check_branch
    %35 = sbr.rel (0) target = $region37
  $region36: #{hgcn_forward.2} parent=0 // pred_region
    _
  $region37: #{hgcn_forward.2} parent=0 // pred_fallthru
    _
  // Predicated region
  $region38: #{hgcn_forward.2} parent=0 // pred_check
    _
  $region39: #{hgcn_forward.2} parent=0 // pred_check_branch
    %37 = sbr.rel (0) target = $region41
  $region40: #{hgcn_forward.2} parent=0 // pred_region
    _
  $region41: #{hgcn_forward.2} parent=0 // pred_fallthru
    _
  // Predicated region
  $region42: #{hgcn_forward.2} parent=0 // pred_check
    _
  $region43: #{hgcn_forward.2} parent=0 // pred_check_branch
    %39 = sbr.rel (0) target = $region45
  $region44: #{hgcn_forward.2} parent=0 // pred_region
    _
  $region45: #{hgcn_forward.2} parent=0 // pred_fallthru
    _
  // Predicated region
  $region46: #{hgcn_forward.2} parent=0 // pred_check
    _
  $region47: #{hgcn_forward.2} parent=0 // pred_check_branch
    %41 = sbr.rel (0) target = $region49
  $region48: #{hgcn_forward.2} parent=0 // pred_region
    _
  $region49: #{hgcn_forward.2} parent=0 // pred_fallthru
    _
  // Predicated region
  $region50: #{hgcn_forward.2} parent=0 // pred_check
    _
  $region51: #{hgcn_forward.2} parent=0 // pred_check_branch
    %43 = sbr.rel (0) target = $region53
  $region52: #{hgcn_forward.2} parent=0 // pred_region
    _
  $region53: #{hgcn_forward.2} parent=0 // pred_fallthru
    _
  %p46 = scmp.eq.s32.totalorder 0, 0
  // Predicated region
  $region54: #{hgcn_forward.2} parent=0 // pred_check
    %p47 = pneg %p46
  $region55: #{hgcn_forward.2} parent=0 // pred_check_branch
    %49 = sbr.rel (%p47) target = $region57
  $region56: #{hgcn_forward.2} parent=0 // pred_region
    %vm50 = vcmask 261120
    %51 = vst.msk [vmem:[#allocation2] sm:$0xff] %vm50, 0.0
    %52 = vst.msk [vmem:[#allocation2 + $0x8] sm:$0xff] %vm50, 0.0
    %53 = vst.msk [vmem:[#allocation2 + $0x10] sm:$0xff] %vm50, 0.0
    %54 = vst.msk [vmem:[#allocation2 + $0x18] sm:$0xff] %vm50, 0.0
    %55 = vst.msk [vmem:[#allocation2 + $0x20] sm:$0xff] %vm50, 0.0
    %56 = vst.msk [vmem:[#allocation2 + $0x28] sm:$0xff] %vm50, 0.0
    %57 = vst.msk [vmem:[#allocation2 + $0x30] sm:$0xff] %vm50, 0.0
    %58 = vst.msk [vmem:[#allocation2 + $0x38] sm:$0xff] %vm50, 0.0
    %59 = vst.msk [vmem:[#allocation3] sm:$0xff] %vm50, 0.0
    %60 = vst.msk [vmem:[#allocation3 + $0x8] sm:$0xff] %vm50, 0.0
    %61 = vst.msk [vmem:[#allocation3 + $0x10] sm:$0xff] %vm50, 0.0
    %62 = vst.msk [vmem:[#allocation3 + $0x18] sm:$0xff] %vm50, 0.0
    %63 = vst.msk [vmem:[#allocation3 + $0x20] sm:$0xff] %vm50, 0.0
    %64 = vst.msk [vmem:[#allocation3 + $0x28] sm:$0xff] %vm50, 0.0
    %65 = vst.msk [vmem:[#allocation3 + $0x30] sm:$0xff] %vm50, 0.0
    %66 = vst.msk [vmem:[#allocation3 + $0x38] sm:$0xff] %vm50, 0.0
  $region57: #{hgcn_forward.2} parent=0 // pred_fallthru
    _
  %v67 = vld [vmem:[%s0] sm:$0xf]
  %v68 = vld [vmem:[%s0 + $0x4] sm:$0xf]
  %v69 = vld [vmem:[%s0 + $0x8] sm:$0xf]
  %v70 = vld [vmem:[%s0 + $0xc] sm:$0xf]
  %v71 = vld [vmem:[%s0 + $0x10] sm:$0xf]
  %v72 = vld [vmem:[%s0 + $0x14] sm:$0xf]
  %v73 = vld [vmem:[%s0 + $0x18] sm:$0xf]
  %v74 = vld [vmem:[%s0 + $0x1c] sm:$0xf]
  %v75 = vld [vmem:[%s0 + $0x20] sm:$0xf]
  %v76 = vld [vmem:[%s0 + $0x24] sm:$0xf]
  %v77 = vld [vmem:[%s0 + $0x28] sm:$0xf]
  %v78 = vld [vmem:[%s0 + $0x2c] sm:$0xf]
  %v79 = vld [vmem:[%s0 + $0x30] sm:$0xf]
  %v80 = vld [vmem:[%s0 + $0x34] sm:$0xf]
  %v81 = vld [vmem:[%s0 + $0x38] sm:$0xf]
  %v82 = vld [vmem:[%s0 + $0x3c] sm:$0xf]
  %v83 = vld [vmem:[%s0 + $0x40] sm:$0xf]
  %v84 = vld [vmem:[%s0 + $0x44] sm:$0xf]
  %v85 = vld [vmem:[%s0 + $0x48] sm:$0xf]
  %v86 = vld [vmem:[%s0 + $0x4c] sm:$0xf]
  %v87 = vld [vmem:[%s0 + $0x50] sm:$0xf]
  %v88 = vld [vmem:[%s0 + $0x54] sm:$0xf]
  %v89 = vld [vmem:[%s0 + $0x58] sm:$0xf]
  %v90 = vld [vmem:[%s0 + $0x5c] sm:$0xf]
  %v91 = vld [vmem:[%s0 + $0x60] sm:$0xf]
  %v92 = vld [vmem:[%s0 + $0x64] sm:$0xf]
  %v93 = vld [vmem:[%s0 + $0x68] sm:$0xf]
  %v94 = vld [vmem:[%s0 + $0x6c] sm:$0xf]
  %v95 = vld [vmem:[%s0 + $0x70] sm:$0xf]
  %v96 = vld [vmem:[%s0 + $0x74] sm:$0xf]
  %v97 = vld [vmem:[%s0 + $0x78] sm:$0xf]
  %v98 = vld [vmem:[%s0 + $0x7c] sm:$0xf]
  %v99 = vld [vmem:[%s1] sm:$0xf]
  %v100 = vld [vmem:[%s1 + $0x4] sm:$0xf]
  %v101 = vld [vmem:[%s1 + $0x8] sm:$0xf]
  %v102 = vld [vmem:[%s1 + $0xc] sm:$0xf]
  %v103 = vld [vmem:[%s1 + $0x10] sm:$0xf]
  %v104 = vld [vmem:[%s1 + $0x14] sm:$0xf]
  %v105 = vld [vmem:[%s1 + $0x18] sm:$0xf]
  %v106 = vld [vmem:[%s1 + $0x1c] sm:$0xf]
  %v107 = vld [vmem:[%s1 + $0x20] sm:$0xf]
  %v108 = vld [vmem:[%s1 + $0x24] sm:$0xf]
  %v109 = vld [vmem:[%s1 + $0x28] sm:$0xf]
  %v110 = vld [vmem:[%s1 + $0x2c] sm:$0xf]
  %v111 = vld [vmem:[%s1 + $0x30] sm:$0xf]
  %v112 = vld [vmem:[%s1 + $0x34] sm:$0xf]
  %v113 = vld [vmem:[%s1 + $0x38] sm:$0xf]
  %v114 = vld [vmem:[%s1 + $0x3c] sm:$0xf]
  %v115 = vld [vmem:[%s1 + $0x40] sm:$0xf]
  %v116 = vld [vmem:[%s1 + $0x44] sm:$0xf]
  %v117 = vld [vmem:[%s1 + $0x48] sm:$0xf]
  %v118 = vld [vmem:[%s1 + $0x4c] sm:$0xf]
  %v119 = vld [vmem:[%s1 + $0x50] sm:$0xf]
  %v120 = vld [vmem:[%s1 + $0x54] sm:$0xf]
  %v121 = vld [vmem:[%s1 + $0x58] sm:$0xf]
  %v122 = vld [vmem:[%s1 + $0x5c] sm:$0xf]
  %v123 = vld [vmem:[%s1 + $0x60] sm:$0xf]
  %v124 = vld [vmem:[%s1 + $0x64] sm:$0xf]
  %v125 = vld [vmem:[%s1 + $0x68] sm:$0xf]
  %v126 = vld [vmem:[%s1 + $0x6c] sm:$0xf]
  %v127 = vld [vmem:[%s1 + $0x70] sm:$0xf]
  %v128 = vld [vmem:[%s1 + $0x74] sm:$0xf]
  %v129 = vld [vmem:[%s1 + $0x78] sm:$0xf]
  %v130 = vld [vmem:[%s1 + $0x7c] sm:$0xf]
  %v131 = vld [vmem:[#allocation2] sm:$0xff]
  %v132 = vld [vmem:[#allocation2 + $0x8] sm:$0xff]
  %v133 = vld [vmem:[#allocation2 + $0x10] sm:$0xff]
  %v134 = vld [vmem:[#allocation2 + $0x18] sm:$0xff]
  %v135 = vld [vmem:[#allocation2 + $0x20] sm:$0xff]
  %v136 = vld [vmem:[#allocation2 + $0x28] sm:$0xff]
  %v137 = vld [vmem:[#allocation2 + $0x30] sm:$0xff]
  %v138 = vld [vmem:[#allocation2 + $0x38] sm:$0xff]
  %v171 = vunpack.c.l.b16 %v67
  %v172 = vunpack.c.l.b16 %v68
  %v173 = vunpack.c.l.b16 %v69
  %v174 = vunpack.c.l.b16 %v70
  %v175 = vunpack.c.l.b16 %v71
  %v176 = vunpack.c.l.b16 %v72
  %v177 = vunpack.c.l.b16 %v73
  %v178 = vunpack.c.l.b16 %v74
  %v179 = vunpack.c.l.b16 %v75
  %v180 = vunpack.c.l.b16 %v76
  %v181 = vunpack.c.l.b16 %v77
  %v182 = vunpack.c.l.b16 %v78
  %v183 = vunpack.c.l.b16 %v79
  %v184 = vunpack.c.l.b16 %v80
  %v185 = vunpack.c.l.b16 %v81
  %v186 = vunpack.c.l.b16 %v82
  %v187 = vunpack.c.l.b16 %v83
  %v188 = vunpack.c.l.b16 %v84
  %v189 = vunpack.c.l.b16 %v85
  %v190 = vunpack.c.l.b16 %v86
  %v191 = vunpack.c.l.b16 %v87
  %v192 = vunpack.c.l.b16 %v88
  %v193 = vunpack.c.l.b16 %v89
  %v194 = vunpack.c.l.b16 %v90
  %v195 = vunpack.c.l.b16 %v91
  %v196 = vunpack.c.l.b16 %v92
  %v197 = vunpack.c.l.b16 %v93
  %v198 = vunpack.c.l.b16 %v94
  %v199 = vunpack.c.l.b16 %v95
  %v200 = vunpack.c.l.b16 %v96
  %v201 = vunpack.c.l.b16 %v97
  %v202 = vunpack.c.l.b16 %v98
  %v203 = vpack.c.b16 %v172, %v171
  %v204 = vpack.c.b16 %v174, %v173
  %v205 = vpack.c.b16 %v176, %v175
  %v206 = vpack.c.b16 %v178, %v177
  %v207 = vpack.c.b16 %v180, %v179
  %v208 = vpack.c.b16 %v182, %v181
  %v209 = vpack.c.b16 %v184, %v183
  %v210 = vpack.c.b16 %v186, %v185
  %v211 = vpack.c.b16 %v188, %v187
  %v212 = vpack.c.b16 %v190, %v189
  %v213 = vpack.c.b16 %v192, %v191
  %v214 = vpack.c.b16 %v194, %v193
  %v215 = vpack.c.b16 %v196, %v195
  %v216 = vpack.c.b16 %v198, %v197
  %v217 = vpack.c.b16 %v200, %v199
  %v218 = vpack.c.b16 %v202, %v201
  %235 = vxpose.xlu0.c.b16.start [1/8] %v203, 128
  %236 = vxpose.xlu0.c.b16.cont [2/8] %v204, 128
  %237 = vxpose.xlu0.c.b16.cont [3/8] %v205, 128
  %238 = vxpose.xlu0.c.b16.cont [4/8] %v206, 128
  %239 = vxpose.xlu0.c.b16.cont [5/8] %v207, 128
  %240 = vxpose.xlu0.c.b16.cont [6/8] %v208, 128
  %241 = vxpose.xlu0.c.b16.cont [7/8] %v209, 128
  %242 = vxpose.xlu0.c.b16.end [8/8] %v210, 128
  %v243 = vpop.trf.xlu0
  %v244 = vpop.trf.xlu0
  %v245 = vpop.trf.xlu0
  %v246 = vpop.trf.xlu0
  %v247 = vpop.trf.xlu0
  %v248 = vpop.trf.xlu0
  %v249 = vpop.trf.xlu0
  %v250 = vpop.trf.xlu0
  %251 = vxpose.xlu0.c.b16.start [1/8] %v211, 128
  %252 = vxpose.xlu0.c.b16.cont [2/8] %v212, 128
  %253 = vxpose.xlu0.c.b16.cont [3/8] %v213, 128
  %254 = vxpose.xlu0.c.b16.cont [4/8] %v214, 128
  %255 = vxpose.xlu0.c.b16.cont [5/8] %v215, 128
  %256 = vxpose.xlu0.c.b16.cont [6/8] %v216, 128
  %257 = vxpose.xlu0.c.b16.cont [7/8] %v217, 128
  %258 = vxpose.xlu0.c.b16.end [8/8] %v218, 128
  %v259 = vpop.trf.xlu0
  %v260 = vpop.trf.xlu0
  %v261 = vpop.trf.xlu0
  %v262 = vpop.trf.xlu0
  %v263 = vpop.trf.xlu0
  %v264 = vpop.trf.xlu0
  %v265 = vpop.trf.xlu0
  %v266 = vpop.trf.xlu0
  %v299 = vunpack.c.l.b16 %v99
  %v300 = vunpack.c.l.b16 %v100
  %v301 = vunpack.c.l.b16 %v101
  %v302 = vunpack.c.l.b16 %v102
  %v303 = vunpack.c.l.b16 %v103
  %v304 = vunpack.c.l.b16 %v104
  %v305 = vunpack.c.l.b16 %v105
  %v306 = vunpack.c.l.b16 %v106
  %v307 = vunpack.c.l.b16 %v107
  %v308 = vunpack.c.l.b16 %v108
  %v309 = vunpack.c.l.b16 %v109
  %v310 = vunpack.c.l.b16 %v110
  %v311 = vunpack.c.l.b16 %v111
  %v312 = vunpack.c.l.b16 %v112
  %v313 = vunpack.c.l.b16 %v113
  %v314 = vunpack.c.l.b16 %v114
  %v315 = vunpack.c.l.b16 %v115
  %v316 = vunpack.c.l.b16 %v116
  %v317 = vunpack.c.l.b16 %v117
  %v318 = vunpack.c.l.b16 %v118
  %v319 = vunpack.c.l.b16 %v119
  %v320 = vunpack.c.l.b16 %v120
  %v321 = vunpack.c.l.b16 %v121
  %v322 = vunpack.c.l.b16 %v122
  %v323 = vunpack.c.l.b16 %v123
  %v324 = vunpack.c.l.b16 %v124
  %v325 = vunpack.c.l.b16 %v125
  %v326 = vunpack.c.l.b16 %v126
  %v327 = vunpack.c.l.b16 %v127
  %v328 = vunpack.c.l.b16 %v128
  %v329 = vunpack.c.l.b16 %v129
  %v330 = vunpack.c.l.b16 %v130
  %v331 = vpack.c.b16 %v300, %v299
  %v332 = vpack.c.b16 %v302, %v301
  %v333 = vpack.c.b16 %v304, %v303
  %v334 = vpack.c.b16 %v306, %v305
  %v335 = vpack.c.b16 %v308, %v307
  %v336 = vpack.c.b16 %v310, %v309
  %v337 = vpack.c.b16 %v312, %v311
  %v338 = vpack.c.b16 %v314, %v313
  %v339 = vpack.c.b16 %v316, %v315
  %v340 = vpack.c.b16 %v318, %v317
  %v341 = vpack.c.b16 %v320, %v319
  %v342 = vpack.c.b16 %v322, %v321
  %v343 = vpack.c.b16 %v324, %v323
  %v344 = vpack.c.b16 %v326, %v325
  %v345 = vpack.c.b16 %v328, %v327
  %v346 = vpack.c.b16 %v330, %v329
  %363 = vmatprep.subr.bf16.mxu0 0
  %364 = vmatpush1.bf16.msra.mxu0 %v331
  %365 = vmatprep.subr.bf16.mxu0 0
  %366 = vmatpush1.bf16.msra.mxu0 %v332
  %367 = vmatprep.subr.bf16.mxu0 0
  %368 = vmatpush1.bf16.msra.mxu0 %v333
  %369 = vmatprep.subr.bf16.mxu0 0
  %370 = vmatpush1.bf16.msra.mxu0 %v334
  %371 = vmatprep.subr.bf16.mxu0 0
  %372 = vmatpush1.bf16.msra.mxu0 %v335
  %373 = vmatprep.subr.bf16.mxu0 0
  %374 = vmatpush1.bf16.msra.mxu0 %v336
  %375 = vmatprep.subr.bf16.mxu0 0
  %376 = vmatpush1.bf16.msra.mxu0 %v337
  %377 = vmatprep.subr.bf16.mxu0 0
  %378 = vmatpush1.bf16.msra.mxu0 %v338
  %379 = vmatprep.subr.bf16.mxu0 0
  %380 = vmatpush1.bf16.msra.mxu0 %v339
  %381 = vmatprep.subr.bf16.mxu0 0
  %382 = vmatpush1.bf16.msra.mxu0 %v340
  %383 = vmatprep.subr.bf16.mxu0 0
  %384 = vmatpush1.bf16.msra.mxu0 %v341
  %385 = vmatprep.subr.bf16.mxu0 0
  %386 = vmatpush1.bf16.msra.mxu0 %v342
  %387 = vmatprep.subr.bf16.mxu0 0
  %388 = vmatpush1.bf16.msra.mxu0 %v343
  %389 = vmatprep.subr.bf16.mxu0 0
  %390 = vmatpush1.bf16.msra.mxu0 %v344
  %391 = vmatprep.subr.bf16.mxu0 0
  %392 = vmatpush1.bf16.msra.mxu0 %v345
  %393 = vmatprep.subr.bf16.mxu0 0
  %394 = vmatpush1.bf16.msra.mxu0 %v346
  %395 = vmatprep.mubr.bf16.mxu0 %v259
  %396 = vmatmul.mubr.bf16.gmra.mrb[0].mxu0 %v243
  %v397 = vpop.f32.mrb[0].mxu0
  %v398 = vadd.f32 0.0, %v397
  %v399 = vpop.f32.mrb[0].mxu0
  %v400 = vpop.f32.mrb[0].mxu0
  %v401 = vadd.f32 0.0, %v400
  %v402 = vpop.f32.mrb[0].mxu0
  %403 = vmatprep.mubr.bf16.mxu0 %v260
  %404 = vmatmul.mubr.bf16.gmra.mrb[0].mxu0 %v244
  %v405 = vpop.f32.mrb[0].mxu0
  %v406 = vadd.f32 0.0, %v405
  %v407 = vpop.f32.mrb[0].mxu0
  %v408 = vpop.f32.mrb[0].mxu0
  %v409 = vadd.f32 0.0, %v408
  %v410 = vpop.f32.mrb[0].mxu0
  %411 = vmatprep.mubr.bf16.mxu0 %v261
  %412 = vmatmul.mubr.bf16.gmra.mrb[0].mxu0 %v245
  %v413 = vpop.f32.mrb[0].mxu0
  %v414 = vadd.f32 0.0, %v413
  %v415 = vpop.f32.mrb[0].mxu0
  %v416 = vpop.f32.mrb[0].mxu0
  %v417 = vadd.f32 0.0, %v416
  %v418 = vpop.f32.mrb[0].mxu0
  %419 = vmatprep.mubr.bf16.mxu0 %v262
  %420 = vmatmul.mubr.bf16.gmra.mrb[0].mxu0 %v246
  %v421 = vpop.f32.mrb[0].mxu0
  %v422 = vadd.f32 0.0, %v421
  %v423 = vpop.f32.mrb[0].mxu0
  %v424 = vpop.f32.mrb[0].mxu0
  %v425 = vadd.f32 0.0, %v424
  %v426 = vpop.f32.mrb[0].mxu0
  %427 = vdwg.mxu0
  %v428 = vadd.f32 %v131, %v398
  %v429 = vadd.f32 %v132, %v401
  %v430 = vadd.f32 %v133, %v406
  %v431 = vadd.f32 %v134, %v409
  %v432 = vadd.f32 %v135, %v414
  %v433 = vadd.f32 %v136, %v417
  %v434 = vadd.f32 %v137, %v422
  %v435 = vadd.f32 %v138, %v425
  %vm436 = vcmask 261120
  %437 = vst.msk [vmem:[#allocation2] sm:$0xff] %vm436, %v428
  %438 = vst.msk [vmem:[#allocation2 + $0x8] sm:$0xff] %vm436, %v429
  %439 = vst.msk [vmem:[#allocation2 + $0x10] sm:$0xff] %vm436, %v430
  %440 = vst.msk [vmem:[#allocation2 + $0x18] sm:$0xff] %vm436, %v431
  %441 = vst.msk [vmem:[#allocation2 + $0x20] sm:$0xff] %vm436, %v432
  %442 = vst.msk [vmem:[#allocation2 + $0x28] sm:$0xff] %vm436, %v433
  %443 = vst.msk [vmem:[#allocation2 + $0x30] sm:$0xff] %vm436, %v434
  %444 = vst.msk [vmem:[#allocation2 + $0x38] sm:$0xff] %vm436, %v435
  %v445 = vld [vmem:[#allocation3] sm:$0xff]
  %v446 = vld [vmem:[#allocation3 + $0x8] sm:$0xff]
  %v447 = vld [vmem:[#allocation3 + $0x10] sm:$0xff]
  %v448 = vld [vmem:[#allocation3 + $0x18] sm:$0xff]
  %v449 = vld [vmem:[#allocation3 + $0x20] sm:$0xff]
  %v450 = vld [vmem:[#allocation3 + $0x28] sm:$0xff]
  %v451 = vld [vmem:[#allocation3 + $0x30] sm:$0xff]
  %v452 = vld [vmem:[#allocation3 + $0x38] sm:$0xff]
  %453 = vmatprep.subr.bf16.mxu0 0
  %454 = vmatpush1.bf16.msra.mxu0 1065369472
  %455 = vmatprep.subr.bf16.mxu0 0
  %456 = vmatpush1.bf16.msra.mxu0 1065369472
  %457 = vmatprep.subr.bf16.mxu0 0
  %458 = vmatpush1.bf16.msra.mxu0 1065369472
  %459 = vmatprep.subr.bf16.mxu0 0
  %460 = vmatpush1.bf16.msra.mxu0 1065369472
  %461 = vmatprep.subr.bf16.mxu0 0
  %462 = vmatpush1.bf16.msra.mxu0 1065369472
  %463 = vmatprep.subr.bf16.mxu0 0
  %464 = vmatpush1.bf16.msra.mxu0 1065369472
  %465 = vmatprep.subr.bf16.mxu0 0
  %466 = vmatpush1.bf16.msra.mxu0 1065369472
  %467 = vmatprep.subr.bf16.mxu0 0
  %468 = vmatpush1.bf16.msra.mxu0 1065369472
  %469 = vmatprep.subr.bf16.mxu0 0
  %470 = vmatpush1.bf16.msra.mxu0 1065369472
  %471 = vmatprep.subr.bf16.mxu0 0
  %472 = vmatpush1.bf16.msra.mxu0 1065369472
  %473 = vmatprep.subr.bf16.mxu0 0
  %474 = vmatpush1.bf16.msra.mxu0 1065369472
  %475 = vmatprep.subr.bf16.mxu0 0
  %476 = vmatpush1.bf16.msra.mxu0 1065369472
  %477 = vmatprep.subr.bf16.mxu0 0
  %478 = vmatpush1.bf16.msra.mxu0 1065369472
  %479 = vmatprep.subr.bf16.mxu0 0
  %480 = vmatpush1.bf16.msra.mxu0 1065369472
  %481 = vmatprep.subr.bf16.mxu0 0
  %482 = vmatpush1.bf16.msra.mxu0 1065369472
  %483 = vmatprep.subr.bf16.mxu0 0
  %484 = vmatpush1.bf16.msra.mxu0 1065369472
  %485 = vmatprep.mubr.bf16.mxu0 %v259
  %486 = vmatmul.mubr.bf16.gmra.mrb[0].mxu0 %v243
  %v487 = vpop.f32.mrb[0].mxu0
  %v488 = vadd.f32 0.0, %v487
  %v489 = vpop.f32.mrb[0].mxu0
  %v490 = vpop.f32.mrb[0].mxu0
  %v491 = vadd.f32 0.0, %v490
  %v492 = vpop.f32.mrb[0].mxu0
  %493 = vmatprep.mubr.bf16.mxu0 %v260
  %494 = vmatmul.mubr.bf16.gmra.mrb[0].mxu0 %v244
  %v495 = vpop.f32.mrb[0].mxu0
  %v496 = vadd.f32 0.0, %v495
  %v497 = vpop.f32.mrb[0].mxu0
  %v498 = vpop.f32.mrb[0].mxu0
  %v499 = vadd.f32 0.0, %v498
  %v500 = vpop.f32.mrb[0].mxu0
  %501 = vmatprep.mubr.bf16.mxu0 %v261
  %502 = vmatmul.mubr.bf16.gmra.mrb[0].mxu0 %v245
  %v503 = vpop.f32.mrb[0].mxu0
  %v504 = vadd.f32 0.0, %v503
  %v505 = vpop.f32.mrb[0].mxu0
  %v506 = vpop.f32.mrb[0].mxu0
  %v507 = vadd.f32 0.0, %v506
  %v508 = vpop.f32.mrb[0].mxu0
  %509 = vmatprep.mubr.bf16.mxu0 %v262
  %510 = vmatmul.mubr.bf16.gmra.mrb[0].mxu0 %v246
  %v511 = vpop.f32.mrb[0].mxu0
  %v512 = vadd.f32 0.0, %v511
  %v513 = vpop.f32.mrb[0].mxu0
  %v514 = vpop.f32.mrb[0].mxu0
  %v515 = vadd.f32 0.0, %v514
  %v516 = vpop.f32.mrb[0].mxu0
  %517 = vdwg.mxu0
  %v518 = vadd.f32 %v445, %v488
  %v519 = vadd.f32 %v446, %v491
  %v520 = vadd.f32 %v447, %v496
  %v521 = vadd.f32 %v448, %v499
  %v522 = vadd.f32 %v449, %v504
  %v523 = vadd.f32 %v450, %v507
  %v524 = vadd.f32 %v451, %v512
  %v525 = vadd.f32 %v452, %v515
  %526 = vst.msk [vmem:[#allocation3] sm:$0xff] %vm436, %v518
  %527 = vst.msk [vmem:[#allocation3 + $0x8] sm:$0xff] %vm436, %v519
  %528 = vst.msk [vmem:[#allocation3 + $0x10] sm:$0xff] %vm436, %v520
  %529 = vst.msk [vmem:[#allocation3 + $0x18] sm:$0xff] %vm436, %v521
  %530 = vst.msk [vmem:[#allocation3 + $0x20] sm:$0xff] %vm436, %v522
  %531 = vst.msk [vmem:[#allocation3 + $0x28] sm:$0xff] %vm436, %v523
  %532 = vst.msk [vmem:[#allocation3 + $0x30] sm:$0xff] %vm436, %v524
  %533 = vst.msk [vmem:[#allocation3 + $0x38] sm:$0xff] %vm436, %v525
  // Predicated region
  $region58: #{hgcn_forward.2} parent=0 // pred_check
    %p534 = pneg %p46
  $region59: #{hgcn_forward.2} parent=0 // pred_check_branch
    %536 = sbr.rel (%p534) target = $region61
  $region60: #{hgcn_forward.2} parent=0 // pred_region
    %v537 = vld [vmem:[#allocation3] sm:$0xff]
    %v538 = vld [vmem:[#allocation3 + $0x8] sm:$0xff]
    %v539 = vld [vmem:[#allocation3 + $0x10] sm:$0xff]
    %v540 = vld [vmem:[#allocation3 + $0x18] sm:$0xff]
    %v541 = vld [vmem:[#allocation3 + $0x20] sm:$0xff]
    %v542 = vld [vmem:[#allocation3 + $0x28] sm:$0xff]
    %v543 = vld [vmem:[#allocation3 + $0x30] sm:$0xff]
    %v544 = vld [vmem:[#allocation3 + $0x38] sm:$0xff]
    %vm545 = vcmp.gt.f32.partialorder %v537, 0.0
    %vm546 = vcmp.gt.f32.partialorder %v538, 0.0
    %vm547 = vcmp.gt.f32.partialorder %v539, 0.0
    %vm548 = vcmp.gt.f32.partialorder %v540, 0.0
    %vm549 = vcmp.gt.f32.partialorder %v541, 0.0
    %vm550 = vcmp.gt.f32.partialorder %v542, 0.0
    %vm551 = vcmp.gt.f32.partialorder %v543, 0.0
    %vm552 = vcmp.gt.f32.partialorder %v544, 0.0
    %v553 = vsel %vm545, %v537, 1.0
    %v554 = vsel %vm546, %v538, 1.0
    %v555 = vsel %vm547, %v539, 1.0
    %v556 = vsel %vm548, %v540, 1.0
    %v557 = vsel %vm549, %v541, 1.0
    %v558 = vsel %vm550, %v542, 1.0
    %v559 = vsel %vm551, %v543, 1.0
    %v560 = vsel %vm552, %v544, 1.0
    %v561 = vld [vmem:[#allocation2] sm:$0xff]
    %v562 = vld [vmem:[#allocation2 + $0x8] sm:$0xff]
    %v563 = vld [vmem:[#allocation2 + $0x10] sm:$0xff]
    %v564 = vld [vmem:[#allocation2 + $0x18] sm:$0xff]
    %v565 = vld [vmem:[#allocation2 + $0x20] sm:$0xff]
    %v566 = vld [vmem:[#allocation2 + $0x28] sm:$0xff]
    %v567 = vld [vmem:[#allocation2 + $0x30] sm:$0xff]
    %v568 = vld [vmem:[#allocation2 + $0x38] sm:$0xff]
    %v569 = vrcp.pop %v553
    %v570 = vmul.f32 1.0, %v569
    %v571 = vrcp.pop %v554
    %v572 = vmul.f32 1.0, %v571
    %v573 = vrcp.pop %v555
    %v574 = vmul.f32 1.0, %v573
    %v575 = vrcp.pop %v556
    %v576 = vmul.f32 1.0, %v575
    %v577 = vrcp.pop %v557
    %v578 = vmul.f32 1.0, %v577
    %v579 = vrcp.pop %v558
    %v580 = vmul.f32 1.0, %v579
    %v581 = vrcp.pop %v559
    %v582 = vmul.f32 1.0, %v581
    %v583 = vrcp.pop %v560
    %v584 = vmul.f32 1.0, %v583
    %v585 = vmul.f32 %v561, %v570
    %v586 = vmul.f32 %v562, %v572
    %v587 = vmul.f32 %v563, %v574
    %v588 = vmul.f32 %v564, %v576
    %v589 = vmul.f32 %v565, %v578
    %v590 = vmul.f32 %v566, %v580
    %v591 = vmul.f32 %v567, %v582
    %v592 = vmul.f32 %v568, %v584
    %v593 = vld [vmem:[%s2] sm:$0xff]
    %v594 = vld [vmem:[%s2 + $0x8] sm:$0xff]
    %v595 = vld [vmem:[%s2 + $0x10] sm:$0xff]
    %v596 = vld [vmem:[%s2 + $0x18] sm:$0xff]
    %v597 = vld [vmem:[%s2 + $0x20] sm:$0xff]
    %v598 = vld [vmem:[%s2 + $0x28] sm:$0xff]
    %v599 = vld [vmem:[%s2 + $0x30] sm:$0xff]
    %v600 = vld [vmem:[%s2 + $0x38] sm:$0xff]
    %v601 = vld [vmem:[%s3] sm:$0xff]
    %v602 = vld [vmem:[%s3 + $0x8] sm:$0xff]
    %v603 = vld [vmem:[%s3 + $0x10] sm:$0xff]
    %v604 = vld [vmem:[%s3 + $0x18] sm:$0xff]
    %v605 = vld [vmem:[%s4] sm:$0x1]
    %v607 = vlaneseq
    %v608 = vshrl.u32 %v607, 7
    %v609 = vsub.s32 0, %v608
    %v610 = vrot.slane %v605, %v609
    %v613 = vsel %vm436, %v585, 0
    %v616 = vsel %vm436, %v586, 0
    %v619 = vsel %vm436, %v587, 0
    %v622 = vsel %vm436, %v588, 0
    %v625 = vsel %vm436, %v589, 0
    %v628 = vsel %vm436, %v590, 0
    %v631 = vsel %vm436, %v591, 0
    %v634 = vsel %vm436, %v592, 0
    %636 = vmatprep.subr.mxu0 0.0
    %637 = vmatpush1.msra.mxu0 %v601
    %638 = vmatprep.subr.mxu0 0.0
    %639 = vmatpush1.msra.mxu0 %v602
    %640 = vmatprep.subr.mxu0 0.0
    %641 = vmatpush1.msra.mxu0 %v603
    %642 = vmatprep.subr.mxu0 0.0
    %643 = vmatpush1.msra.mxu0 %v604
    %644 = vmatprep.subr.mxu0 0.0
    %645 = vmatpush1.msra.mxu0 0.0
    %646 = vmatprep.subr.mxu0 0.0
    %647 = vmatpush1.msra.mxu0 0.0
    %648 = vmatprep.subr.mxu0 0.0
    %649 = vmatpush1.msra.mxu0 0.0
    %650 = vmatprep.subr.mxu0 0.0
    %651 = vmatpush1.msra.mxu0 0.0
    %652 = vmatprep.subr.mxu0 0.0
    %653 = vmatpush1.msra.mxu0 0.0
    %654 = vmatprep.subr.mxu0 0.0
    %655 = vmatpush1.msra.mxu0 0.0
    %656 = vmatprep.subr.mxu0 0.0
    %657 = vmatpush1.msra.mxu0 0.0
    %658 = vmatprep.subr.mxu0 0.0
    %659 = vmatpush1.msra.mxu0 0.0
    %660 = vmatprep.subr.mxu0 0.0
    %661 = vmatpush1.msra.mxu0 0.0
    %662 = vmatprep.subr.mxu0 0.0
    %663 = vmatpush1.msra.mxu0 0.0
    %664 = vmatprep.subr.mxu0 0.0
    %665 = vmatpush1.msra.mxu0 0.0
    %666 = vmatprep.subr.mxu0 0.0
    %667 = vmatpush1.msra.mxu0 0.0
    %668 = vmatprep.subr.mxu0 0.0
    %669 = vmatpush1.msra.mxu0 0.0
    %670 = vmatprep.subr.mxu0 0.0
    %671 = vmatpush1.msra.mxu0 0.0
    %672 = vmatprep.subr.mxu0 0.0
    %673 = vmatpush1.msra.mxu0 0.0
    %674 = vmatprep.subr.mxu0 0.0
    %675 = vmatpush1.msra.mxu0 0.0
    %676 = vmatprep.subr.mxu0 0.0
    %677 = vmatpush1.msra.mxu0 0.0
    %678 = vmatprep.subr.mxu0 0.0
    %679 = vmatpush1.msra.mxu0 0.0
    %680 = vmatprep.subr.mxu0 0.0
    %681 = vmatpush1.msra.mxu0 0.0
    %682 = vmatprep.subr.mxu0 0.0
    %683 = vmatpush1.msra.mxu0 0.0
    %684 = vmatprep.subr.mxu0 0.0
    %685 = vmatpush1.msra.mxu0 0.0
    %686 = vmatprep.subr.mxu0 0.0
    %687 = vmatpush1.msra.mxu0 0.0
    %688 = vmatprep.subr.mxu0 0.0
    %689 = vmatpush1.msra.mxu0 0.0
    %690 = vmatprep.subr.mxu0 0.0
    %691 = vmatpush1.msra.mxu0 0.0
    %692 = vmatprep.subr.mxu0 0.0
    %693 = vmatpush1.msra.mxu0 0.0
    %694 = vmatprep.subr.mxu0 0.0
    %695 = vmatpush1.msra.mxu0 0.0
    %696 = vmatprep.subr.mxu0 0.0
    %697 = vmatpush1.msra.mxu0 0.0
    %698 = vmatprep.subr.mxu0 0.0
    %699 = vmatpush1.msra.mxu0 0.0
    %700 = vmatprep.mubr.f32.mxu0 0.0
    %701 = vmatmul.mubr.f32.gmra.mrb[0].mxu0 %v613
    %v702 = vpop.f32.mrb[0].mxu0
    %v703 = vadd.f32 %v610, %v702
    %v704 = vpop.f32.mrb[0].mxu0
    %705 = vmatprep.mubr.f32.mxu0 0.0
    %706 = vmatmul.mubr.f32.gmra.mrb[0].mxu0 %v616
    %v707 = vpop.f32.mrb[0].mxu0
    %v708 = vadd.f32 %v610, %v707
    %v709 = vpop.f32.mrb[0].mxu0
    %710 = vmatprep.mubr.f32.mxu0 0.0
    %711 = vmatmul.mubr.f32.gmra.mrb[0].mxu0 %v619
    %v712 = vpop.f32.mrb[0].mxu0
    %v713 = vadd.f32 %v610, %v712
    %v714 = vpop.f32.mrb[0].mxu0
    %715 = vmatprep.mubr.f32.mxu0 0.0
    %716 = vmatmul.mubr.f32.gmra.mrb[0].mxu0 %v622
    %v717 = vpop.f32.mrb[0].mxu0
    %v718 = vadd.f32 %v610, %v717
    %v719 = vpop.f32.mrb[0].mxu0
    %720 = vmatprep.mubr.f32.mxu0 0.0
    %721 = vmatmul.mubr.f32.gmra.mrb[0].mxu0 %v625
    %v722 = vpop.f32.mrb[0].mxu0
    %v723 = vadd.f32 %v610, %v722
    %v724 = vpop.f32.mrb[0].mxu0
    %725 = vmatprep.mubr.f32.mxu0 0.0
    %726 = vmatmul.mubr.f32.gmra.mrb[0].mxu0 %v628
    %v727 = vpop.f32.mrb[0].mxu0
    %v728 = vadd.f32 %v610, %v727
    %v729 = vpop.f32.mrb[0].mxu0
    %730 = vmatprep.mubr.f32.mxu0 0.0
    %731 = vmatmul.mubr.f32.gmra.mrb[0].mxu0 %v631
    %v732 = vpop.f32.mrb[0].mxu0
    %v733 = vadd.f32 %v610, %v732
    %v734 = vpop.f32.mrb[0].mxu0
    %735 = vmatprep.mubr.f32.mxu0 0.0
    %736 = vmatmul.mubr.f32.gmra.mrb[0].mxu0 %v634
    %v737 = vpop.f32.mrb[0].mxu0
    %v738 = vadd.f32 %v610, %v737
    %v739 = vpop.f32.mrb[0].mxu0
    %740 = vdwg.mxu0
    %vm741 = vcmask 523264
    %v743 = vsel %vm741, %v593, 0
    %v746 = vsel %vm741, %v594, 0
    %v749 = vsel %vm741, %v595, 0
    %v752 = vsel %vm741, %v596, 0
    %v755 = vsel %vm741, %v597, 0
    %v758 = vsel %vm741, %v598, 0
    %v761 = vsel %vm741, %v599, 0
    %v764 = vsel %vm741, %v600, 0
    %766 = vmatprep.subr.mxu0 0.0
    %767 = vmatpush1.msra.mxu0 %v703
    %768 = vmatprep.subr.mxu0 0.0
    %769 = vmatpush1.msra.mxu0 %v708
    %770 = vmatprep.subr.mxu0 0.0
    %771 = vmatpush1.msra.mxu0 %v713
    %772 = vmatprep.subr.mxu0 0.0
    %773 = vmatpush1.msra.mxu0 %v718
    %774 = vmatprep.subr.mxu0 0.0
    %775 = vmatpush1.msra.mxu0 %v723
    %776 = vmatprep.subr.mxu0 0.0
    %777 = vmatpush1.msra.mxu0 %v728
    %778 = vmatprep.subr.mxu0 0.0
    %779 = vmatpush1.msra.mxu0 %v733
    %780 = vmatprep.subr.mxu0 0.0
    %781 = vmatpush1.msra.mxu0 %v738
    %782 = vmatprep.subr.mxu0 0.0
    %783 = vmatpush1.msra.mxu0 0.0
    %784 = vmatprep.subr.mxu0 0.0
    %785 = vmatpush1.msra.mxu0 0.0
    %786 = vmatprep.subr.mxu0 0.0
    %787 = vmatpush1.msra.mxu0 0.0
    %788 = vmatprep.subr.mxu0 0.0
    %789 = vmatpush1.msra.mxu0 0.0
    %790 = vmatprep.subr.mxu0 0.0
    %791 = vmatpush1.msra.mxu0 0.0
    %792 = vmatprep.subr.mxu0 0.0
    %793 = vmatpush1.msra.mxu0 0.0
    %794 = vmatprep.subr.mxu0 0.0
    %795 = vmatpush1.msra.mxu0 0.0
    %796 = vmatprep.subr.mxu0 0.0
    %797 = vmatpush1.msra.mxu0 0.0
    %798 = vmatprep.subr.mxu0 0.0
    %799 = vmatpush1.msra.mxu0 0.0
    %800 = vmatprep.subr.mxu0 0.0
    %801 = vmatpush1.msra.mxu0 0.0
    %802 = vmatprep.subr.mxu0 0.0
    %803 = vmatpush1.msra.mxu0 0.0
    %804 = vmatprep.subr.mxu0 0.0
    %805 = vmatpush1.msra.mxu0 0.0
    %806 = vmatprep.subr.mxu0 0.0
    %807 = vmatpush1.msra.mxu0 0.0
    %808 = vmatprep.subr.mxu0 0.0
    %809 = vmatpush1.msra.mxu0 0.0
    %810 = vmatprep.subr.mxu0 0.0
    %811 = vmatpush1.msra.mxu0 0.0
    %812 = vmatprep.subr.mxu0 0.0
    %813 = vmatpush1.msra.mxu0 0.0
    %814 = vmatprep.subr.mxu0 0.0
    %815 = vmatpush1.msra.mxu0 0.0
    %816 = vmatprep.subr.mxu0 0.0
    %817 = vmatpush1.msra.mxu0 0.0
    %818 = vmatprep.subr.mxu0 0.0
    %819 = vmatpush1.msra.mxu0 0.0
    %820 = vmatprep.subr.mxu0 0.0
    %821 = vmatpush1.msra.mxu0 0.0
    %822 = vmatprep.subr.mxu0 0.0
    %823 = vmatpush1.msra.mxu0 0.0
    %824 = vmatprep.subr.mxu0 0.0
    %825 = vmatpush1.msra.mxu0 0.0
    %826 = vmatprep.subr.mxu0 0.0
    %827 = vmatpush1.msra.mxu0 0.0
    %828 = vmatprep.subr.mxu0 0.0
    %829 = vmatpush1.msra.mxu0 0.0
    %830 = vmatprep.mubr.f32.mxu0 0.0
    %831 = vmatmul.mubr.f32.gmra.mrb[0].mxu0 %v743
    %v832 = vpop.f32.mrb[0].mxu0
    %v833 = vadd.f32 0.0, %v832
    %v834 = vpop.f32.mrb[0].mxu0
    %835 = vmatprep.mubr.f32.mxu0 0.0
    %836 = vmatmul.mubr.f32.gmra.mrb[0].mxu0 %v746
    %v837 = vpop.f32.mrb[0].mxu0
    %v838 = vadd.f32 0.0, %v837
    %v839 = vpop.f32.mrb[0].mxu0
    %840 = vmatprep.mubr.f32.mxu0 0.0
    %841 = vmatmul.mubr.f32.gmra.mrb[0].mxu0 %v749
    %v842 = vpop.f32.mrb[0].mxu0
    %v843 = vadd.f32 0.0, %v842
    %v844 = vpop.f32.mrb[0].mxu0
    %845 = vmatprep.mubr.f32.mxu0 0.0
    %846 = vmatmul.mubr.f32.gmra.mrb[0].mxu0 %v752
    %v847 = vpop.f32.mrb[0].mxu0
    %v848 = vadd.f32 0.0, %v847
    %v849 = vpop.f32.mrb[0].mxu0
    %850 = vmatprep.mubr.f32.mxu0 0.0
    %851 = vmatmul.mubr.f32.gmra.mrb[0].mxu0 %v755
    %v852 = vpop.f32.mrb[0].mxu0
    %v853 = vadd.f32 0.0, %v852
    %v854 = vpop.f32.mrb[0].mxu0
    %855 = vmatprep.mubr.f32.mxu0 0.0
    %856 = vmatmul.mubr.f32.gmra.mrb[0].mxu0 %v758
    %v857 = vpop.f32.mrb[0].mxu0
    %v858 = vadd.f32 0.0, %v857
    %v859 = vpop.f32.mrb[0].mxu0
    %860 = vmatprep.mubr.f32.mxu0 0.0
    %861 = vmatmul.mubr.f32.gmra.mrb[0].mxu0 %v761
    %v862 = vpop.f32.mrb[0].mxu0
    %v863 = vadd.f32 0.0, %v862
    %v864 = vpop.f32.mrb[0].mxu0
    %865 = vmatprep.mubr.f32.mxu0 0.0
    %866 = vmatmul.mubr.f32.gmra.mrb[0].mxu0 %v764
    %v867 = vpop.f32.mrb[0].mxu0
    %v868 = vadd.f32 0.0, %v867
    %v869 = vpop.f32.mrb[0].mxu0
    %870 = vdwg.mxu0
    %v871 = vld [vmem:[%s5] sm:$0x1]
    %v872 = vld [vmem:[%s6] sm:$0x1]
    %v873 = vsel %vm436, %v833, 0.0
    %v874 = vsel %vm436, %v838, 0.0
    %v875 = vadd.f32 %v873, %v874
    %v876 = vsel %vm436, %v843, 0.0
    %v877 = vadd.f32 %v875, %v876
    %v878 = vsel %vm436, %v848, 0.0
    %v879 = vadd.f32 %v877, %v878
    %v880 = vsel %vm436, %v853, 0.0
    %v881 = vadd.f32 %v879, %v880
    %v882 = vsel %vm436, %v858, 0.0
    %v883 = vadd.f32 %v881, %v882
    %v884 = vsel %vm436, %v863, 0.0
    %v885 = vadd.f32 %v883, %v884
    %v886 = vsel %vm436, %v868, 0.0
    %v887 = vadd.f32 %v885, %v886
    %v888 = vrot.slane %v887, 4
    %v889 = vadd.f32 %v887, %v888
    %v890 = vrot.slane %v889, 2
    %v891 = vadd.f32 %v889, %v890
    %v892 = vrot.slane %v891, 1
    %v893 = vadd.f32 %v891, %v892
    %v894 = vmul.f32 %v833, %v833
    %v895 = vmul.f32 %v838, %v838
    %v896 = vmul.f32 %v843, %v843
    %v897 = vmul.f32 %v848, %v848
    %v898 = vmul.f32 %v853, %v853
    %v899 = vmul.f32 %v858, %v858
    %v900 = vmul.f32 %v863, %v863
    %v901 = vmul.f32 %v868, %v868
    %v902 = vsel %vm436, %v894, 0.0
    %v903 = vsel %vm436, %v895, 0.0
    %v904 = vadd.f32 %v902, %v903
    %v905 = vsel %vm436, %v896, 0.0
    %v906 = vadd.f32 %v904, %v905
    %v907 = vsel %vm436, %v897, 0.0
    %v908 = vadd.f32 %v906, %v907
    %v909 = vsel %vm436, %v898, 0.0
    %v910 = vadd.f32 %v908, %v909
    %v911 = vsel %vm436, %v899, 0.0
    %v912 = vadd.f32 %v910, %v911
    %v913 = vsel %vm436, %v900, 0.0
    %v914 = vadd.f32 %v912, %v913
    %v915 = vsel %vm436, %v901, 0.0
    %v916 = vadd.f32 %v914, %v915
    %v917 = vrot.slane %v916, 4
    %v918 = vadd.f32 %v916, %v917
    %v919 = vrot.slane %v918, 2
    %v920 = vadd.f32 %v918, %v919
    %v921 = vrot.slane %v920, 1
    %v922 = vadd.f32 %v920, %v921
    %v923 = vmul.f32 %v893, 0.015625
    %v924 = vmul.f32 %v922, 0.015625
    %v925 = vmul.f32 %v923, %v923
    %v926 = vsub.f32 %v924, %v925
    %v927 = vmax.f32 %v926, 0.0
    %v928 = vsub.f32 %v833, %v923
    %v929 = vsub.f32 %v838, %v923
    %v930 = vsub.f32 %v843, %v923
    %v931 = vsub.f32 %v848, %v923
    %v932 = vsub.f32 %v853, %v923
    %v933 = vsub.f32 %v858, %v923
    %v934 = vsub.f32 %v863, %v923
    %v935 = vsub.f32 %v868, %v923
    %v936 = vadd.f32 %v927, 1e-05
    %v937 = vrsqrt.pop %v936
    %v938 = vmul.f32 %v928, %v937
    %v939 = vmul.f32 %v929, %v937
    %v940 = vmul.f32 %v930, %v937
    %v941 = vmul.f32 %v931, %v937
    %v942 = vmul.f32 %v932, %v937
    %v943 = vmul.f32 %v933, %v937
    %v944 = vmul.f32 %v934, %v937
    %v945 = vmul.f32 %v935, %v937
    %v947 = vlaneseq
    %v948 = vshrl.u32 %v947, 7
    %v949 = vsub.s32 0, %v948
    %v950 = vrot.slane %v871, %v949
    %v952 = vmul.f32 %v938, %v950
    %v953 = vmul.f32 %v939, %v950
    %v954 = vmul.f32 %v940, %v950
    %v955 = vmul.f32 %v941, %v950
    %v956 = vmul.f32 %v942, %v950
    %v957 = vmul.f32 %v943, %v950
    %v958 = vmul.f32 %v944, %v950
    %v959 = vmul.f32 %v945, %v950
    %v961 = vlaneseq
    %v962 = vshrl.u32 %v961, 7
    %v963 = vsub.s32 0, %v962
    %v964 = vrot.slane %v872, %v963
    %v966 = vadd.f32 %v952, %v964
    %v967 = vadd.f32 %v953, %v964
    %v968 = vadd.f32 %v954, %v964
    %v969 = vadd.f32 %v955, %v964
    %v970 = vadd.f32 %v956, %v964
    %v971 = vadd.f32 %v957, %v964
    %v972 = vadd.f32 %v958, %v964
    %v973 = vadd.f32 %v959, %v964
    %v974 = vmax.f32 %v966, 0.0
    %v975 = vmax.f32 %v967, 0.0
    %v976 = vmax.f32 %v968, 0.0
    %v977 = vmax.f32 %v969, 0.0
    %v978 = vmax.f32 %v970, 0.0
    %v979 = vmax.f32 %v971, 0.0
    %v980 = vmax.f32 %v972, 0.0
    %v981 = vmax.f32 %v973, 0.0
    %v982 = vld [vmem:[%s7] sm:$0xff]
    %v983 = vld [vmem:[%s7 + $0x8] sm:$0xff]
    %v984 = vld [vmem:[%s7 + $0x10] sm:$0xff]
    %v985 = vld [vmem:[%s7 + $0x18] sm:$0xff]
    %v986 = vld [vmem:[%s8] sm:$0x1]
    %v988 = vlaneseq
    %v989 = vshrl.u32 %v988, 7
    %v990 = vsub.s32 0, %v989
    %v991 = vrot.slane %v986, %v990
    %v994 = vsel %vm436, %v974, 0
    %v997 = vsel %vm436, %v975, 0
    %v1000 = vsel %vm436, %v976, 0
    %v1003 = vsel %vm436, %v977, 0
    %v1006 = vsel %vm436, %v978, 0
    %v1009 = vsel %vm436, %v979, 0
    %v1012 = vsel %vm436, %v980, 0
    %v1015 = vsel %vm436, %v981, 0
    %1017 = vmatprep.subr.mxu0 0.0
    %1018 = vmatpush1.msra.mxu0 %v982
    %1019 = vmatprep.subr.mxu0 0.0
    %1020 = vmatpush1.msra.mxu0 %v983
    %1021 = vmatprep.subr.mxu0 0.0
    %1022 = vmatpush1.msra.mxu0 %v984
    %1023 = vmatprep.subr.mxu0 0.0
    %1024 = vmatpush1.msra.mxu0 %v985
    %1025 = vmatprep.subr.mxu0 0.0
    %1026 = vmatpush1.msra.mxu0 0.0
    %1027 = vmatprep.subr.mxu0 0.0
    %1028 = vmatpush1.msra.mxu0 0.0
    %1029 = vmatprep.subr.mxu0 0.0
    %1030 = vmatpush1.msra.mxu0 0.0
    %1031 = vmatprep.subr.mxu0 0.0
    %1032 = vmatpush1.msra.mxu0 0.0
    %1033 = vmatprep.subr.mxu0 0.0
    %1034 = vmatpush1.msra.mxu0 0.0
    %1035 = vmatprep.subr.mxu0 0.0
    %1036 = vmatpush1.msra.mxu0 0.0
    %1037 = vmatprep.subr.mxu0 0.0
    %1038 = vmatpush1.msra.mxu0 0.0
    %1039 = vmatprep.subr.mxu0 0.0
    %1040 = vmatpush1.msra.mxu0 0.0
    %1041 = vmatprep.subr.mxu0 0.0
    %1042 = vmatpush1.msra.mxu0 0.0
    %1043 = vmatprep.subr.mxu0 0.0
    %1044 = vmatpush1.msra.mxu0 0.0
    %1045 = vmatprep.subr.mxu0 0.0
    %1046 = vmatpush1.msra.mxu0 0.0
    %1047 = vmatprep.subr.mxu0 0.0
    %1048 = vmatpush1.msra.mxu0 0.0
    %1049 = vmatprep.subr.mxu0 0.0
    %1050 = vmatpush1.msra.mxu0 0.0
    %1051 = vmatprep.subr.mxu0 0.0
    %1052 = vmatpush1.msra.mxu0 0.0
    %1053 = vmatprep.subr.mxu0 0.0
    %1054 = vmatpush1.msra.mxu0 0.0
    %1055 = vmatprep.subr.mxu0 0.0
    %1056 = vmatpush1.msra.mxu0 0.0
    %1057 = vmatprep.subr.mxu0 0.0
    %1058 = vmatpush1.msra.mxu0 0.0
    %1059 = vmatprep.subr.mxu0 0.0
    %1060 = vmatpush1.msra.mxu0 0.0
    %1061 = vmatprep.subr.mxu0 0.0
    %1062 = vmatpush1.msra.mxu0 0.0
    %1063 = vmatprep.subr.mxu0 0.0
    %1064 = vmatpush1.msra.mxu0 0.0
    %1065 = vmatprep.subr.mxu0 0.0
    %1066 = vmatpush1.msra.mxu0 0.0
    %1067 = vmatprep.subr.mxu0 0.0
    %1068 = vmatpush1.msra.mxu0 0.0
    %1069 = vmatprep.subr.mxu0 0.0
    %1070 = vmatpush1.msra.mxu0 0.0
    %1071 = vmatprep.subr.mxu0 0.0
    %1072 = vmatpush1.msra.mxu0 0.0
    %1073 = vmatprep.subr.mxu0 0.0
    %1074 = vmatpush1.msra.mxu0 0.0
    %1075 = vmatprep.subr.mxu0 0.0
    %1076 = vmatpush1.msra.mxu0 0.0
    %1077 = vmatprep.subr.mxu0 0.0
    %1078 = vmatpush1.msra.mxu0 0.0
    %1079 = vmatprep.subr.mxu0 0.0
    %1080 = vmatpush1.msra.mxu0 0.0
    %1081 = vmatprep.mubr.f32.mxu0 0.0
    %1082 = vmatmul.mubr.f32.gmra.mrb[0].mxu0 %v994
    %v1083 = vpop.f32.mrb[0].mxu0
    %v1084 = vadd.f32 %v991, %v1083
    %v1085 = vpop.f32.mrb[0].mxu0
    %1086 = vmatprep.mubr.f32.mxu0 0.0
    %1087 = vmatmul.mubr.f32.gmra.mrb[0].mxu0 %v997
    %v1088 = vpop.f32.mrb[0].mxu0
    %v1089 = vadd.f32 %v991, %v1088
    %v1090 = vpop.f32.mrb[0].mxu0
    %1091 = vmatprep.mubr.f32.mxu0 0.0
    %1092 = vmatmul.mubr.f32.gmra.mrb[0].mxu0 %v1000
    %v1093 = vpop.f32.mrb[0].mxu0
    %v1094 = vadd.f32 %v991, %v1093
    %v1095 = vpop.f32.mrb[0].mxu0
    %1096 = vmatprep.mubr.f32.mxu0 0.0
    %1097 = vmatmul.mubr.f32.gmra.mrb[0].mxu0 %v1003
    %v1098 = vpop.f32.mrb[0].mxu0
    %v1099 = vadd.f32 %v991, %v1098
    %v1100 = vpop.f32.mrb[0].mxu0
    %1101 = vmatprep.mubr.f32.mxu0 0.0
    %1102 = vmatmul.mubr.f32.gmra.mrb[0].mxu0 %v1006
    %v1103 = vpop.f32.mrb[0].mxu0
    %v1104 = vadd.f32 %v991, %v1103
    %v1105 = vpop.f32.mrb[0].mxu0
    %1106 = vmatprep.mubr.f32.mxu0 0.0
    %1107 = vmatmul.mubr.f32.gmra.mrb[0].mxu0 %v1009
    %v1108 = vpop.f32.mrb[0].mxu0
    %v1109 = vadd.f32 %v991, %v1108
    %v1110 = vpop.f32.mrb[0].mxu0
    %1111 = vmatprep.mubr.f32.mxu0 0.0
    %1112 = vmatmul.mubr.f32.gmra.mrb[0].mxu0 %v1012
    %v1113 = vpop.f32.mrb[0].mxu0
    %v1114 = vadd.f32 %v991, %v1113
    %v1115 = vpop.f32.mrb[0].mxu0
    %1116 = vmatprep.mubr.f32.mxu0 0.0
    %1117 = vmatmul.mubr.f32.gmra.mrb[0].mxu0 %v1015
    %v1118 = vpop.f32.mrb[0].mxu0
    %v1119 = vadd.f32 %v991, %v1118
    %v1120 = vpop.f32.mrb[0].mxu0
    %1121 = vdwg.mxu0
    %1122 = vmatprep.subr.mxu0 0.0
    %1123 = vmatpush1.msra.mxu0 %v1084
    %1124 = vmatprep.subr.mxu0 0.0
    %1125 = vmatpush1.msra.mxu0 %v1089
    %1126 = vmatprep.subr.mxu0 0.0
    %1127 = vmatpush1.msra.mxu0 %v1094
    %1128 = vmatprep.subr.mxu0 0.0
    %1129 = vmatpush1.msra.mxu0 %v1099
    %1130 = vmatprep.subr.mxu0 0.0
    %1131 = vmatpush1.msra.mxu0 %v1104
    %1132 = vmatprep.subr.mxu0 0.0
    %1133 = vmatpush1.msra.mxu0 %v1109
    %1134 = vmatprep.subr.mxu0 0.0
    %1135 = vmatpush1.msra.mxu0 %v1114
    %1136 = vmatprep.subr.mxu0 0.0
    %1137 = vmatpush1.msra.mxu0 %v1119
    %1138 = vmatprep.subr.mxu0 0.0
    %1139 = vmatpush1.msra.mxu0 0.0
    %1140 = vmatprep.subr.mxu0 0.0
    %1141 = vmatpush1.msra.mxu0 0.0
    %1142 = vmatprep.subr.mxu0 0.0
    %1143 = vmatpush1.msra.mxu0 0.0
    %1144 = vmatprep.subr.mxu0 0.0
    %1145 = vmatpush1.msra.mxu0 0.0
    %1146 = vmatprep.subr.mxu0 0.0
    %1147 = vmatpush1.msra.mxu0 0.0
    %1148 = vmatprep.subr.mxu0 0.0
    %1149 = vmatpush1.msra.mxu0 0.0
    %1150 = vmatprep.subr.mxu0 0.0
    %1151 = vmatpush1.msra.mxu0 0.0
    %1152 = vmatprep.subr.mxu0 0.0
    %1153 = vmatpush1.msra.mxu0 0.0
    %1154 = vmatprep.subr.mxu0 0.0
    %1155 = vmatpush1.msra.mxu0 0.0
    %1156 = vmatprep.subr.mxu0 0.0
    %1157 = vmatpush1.msra.mxu0 0.0
    %1158 = vmatprep.subr.mxu0 0.0
    %1159 = vmatpush1.msra.mxu0 0.0
    %1160 = vmatprep.subr.mxu0 0.0
    %1161 = vmatpush1.msra.mxu0 0.0
    %1162 = vmatprep.subr.mxu0 0.0
    %1163 = vmatpush1.msra.mxu0 0.0
    %1164 = vmatprep.subr.mxu0 0.0
    %1165 = vmatpush1.msra.mxu0 0.0
    %1166 = vmatprep.subr.mxu0 0.0
    %1167 = vmatpush1.msra.mxu0 0.0
    %1168 = vmatprep.subr.mxu0 0.0
    %1169 = vmatpush1.msra.mxu0 0.0
    %1170 = vmatprep.subr.mxu0 0.0
    %1171 = vmatpush1.msra.mxu0 0.0
    %1172 = vmatprep.subr.mxu0 0.0
    %1173 = vmatpush1.msra.mxu0 0.0
    %1174 = vmatprep.subr.mxu0 0.0
    %1175 = vmatpush1.msra.mxu0 0.0
    %1176 = vmatprep.subr.mxu0 0.0
    %1177 = vmatpush1.msra.mxu0 0.0
    %1178 = vmatprep.subr.mxu0 0.0
    %1179 = vmatpush1.msra.mxu0 0.0
    %1180 = vmatprep.subr.mxu0 0.0
    %1181 = vmatpush1.msra.mxu0 0.0
    %1182 = vmatprep.subr.mxu0 0.0
    %1183 = vmatpush1.msra.mxu0 0.0
    %1184 = vmatprep.subr.mxu0 0.0
    %1185 = vmatpush1.msra.mxu0 0.0
    %1186 = vmatprep.mubr.f32.mxu0 0.0
    %1187 = vmatmul.mubr.f32.gmra.mrb[0].mxu0 %v743
    %v1188 = vpop.f32.mrb[0].mxu0
    %v1189 = vadd.f32 0.0, %v1188
    %v1190 = vpop.f32.mrb[0].mxu0
    %1191 = vmatprep.mubr.f32.mxu0 0.0
    %1192 = vmatmul.mubr.f32.gmra.mrb[0].mxu0 %v746
    %v1193 = vpop.f32.mrb[0].mxu0
    %v1194 = vadd.f32 0.0, %v1193
    %v1195 = vpop.f32.mrb[0].mxu0
    %1196 = vmatprep.mubr.f32.mxu0 0.0
    %1197 = vmatmul.mubr.f32.gmra.mrb[0].mxu0 %v749
    %v1198 = vpop.f32.mrb[0].mxu0
    %v1199 = vadd.f32 0.0, %v1198
    %v1200 = vpop.f32.mrb[0].mxu0
    %1201 = vmatprep.mubr.f32.mxu0 0.0
    %1202 = vmatmul.mubr.f32.gmra.mrb[0].mxu0 %v752
    %v1203 = vpop.f32.mrb[0].mxu0
    %v1204 = vadd.f32 0.0, %v1203
    %v1205 = vpop.f32.mrb[0].mxu0
    %1206 = vmatprep.mubr.f32.mxu0 0.0
    %1207 = vmatmul.mubr.f32.gmra.mrb[0].mxu0 %v755
    %v1208 = vpop.f32.mrb[0].mxu0
    %v1209 = vadd.f32 0.0, %v1208
    %v1210 = vpop.f32.mrb[0].mxu0
    %1211 = vmatprep.mubr.f32.mxu0 0.0
    %1212 = vmatmul.mubr.f32.gmra.mrb[0].mxu0 %v758
    %v1213 = vpop.f32.mrb[0].mxu0
    %v1214 = vadd.f32 0.0, %v1213
    %v1215 = vpop.f32.mrb[0].mxu0
    %1216 = vmatprep.mubr.f32.mxu0 0.0
    %1217 = vmatmul.mubr.f32.gmra.mrb[0].mxu0 %v761
    %v1218 = vpop.f32.mrb[0].mxu0
    %v1219 = vadd.f32 0.0, %v1218
    %v1220 = vpop.f32.mrb[0].mxu0
    %1221 = vmatprep.mubr.f32.mxu0 0.0
    %1222 = vmatmul.mubr.f32.gmra.mrb[0].mxu0 %v764
    %v1223 = vpop.f32.mrb[0].mxu0
    %v1224 = vadd.f32 0.0, %v1223
    %v1225 = vpop.f32.mrb[0].mxu0
    %1226 = vdwg.mxu0
    %v1227 = vld [vmem:[%s9] sm:$0x1]
    %v1228 = vld [vmem:[%s10] sm:$0x1]
    %v1229 = vsel %vm741, %v1189, 0.0
    %v1230 = vsel %vm741, %v1194, 0.0
    %v1231 = vadd.f32 %v1229, %v1230
    %v1232 = vsel %vm741, %v1199, 0.0
    %v1233 = vadd.f32 %v1231, %v1232
    %v1234 = vsel %vm741, %v1204, 0.0
    %v1235 = vadd.f32 %v1233, %v1234
    %v1236 = vsel %vm741, %v1209, 0.0
    %v1237 = vadd.f32 %v1235, %v1236
    %v1238 = vsel %vm741, %v1214, 0.0
    %v1239 = vadd.f32 %v1237, %v1238
    %v1240 = vsel %vm741, %v1219, 0.0
    %v1241 = vadd.f32 %v1239, %v1240
    %v1242 = vsel %vm741, %v1224, 0.0
    %v1243 = vadd.f32 %v1241, %v1242
    %v1244 = vrot.slane %v1243, 4
    %v1245 = vadd.f32 %v1243, %v1244
    %v1246 = vrot.slane %v1245, 2
    %v1247 = vadd.f32 %v1245, %v1246
    %v1248 = vrot.slane %v1247, 1
    %v1249 = vadd.f32 %v1247, %v1248
    %v1250 = vmul.f32 %v1189, %v1189
    %v1251 = vmul.f32 %v1194, %v1194
    %v1252 = vmul.f32 %v1199, %v1199
    %v1253 = vmul.f32 %v1204, %v1204
    %v1254 = vmul.f32 %v1209, %v1209
    %v1255 = vmul.f32 %v1214, %v1214
    %v1256 = vmul.f32 %v1219, %v1219
    %v1257 = vmul.f32 %v1224, %v1224
    %v1258 = vsel %vm741, %v1250, 0.0
    %v1259 = vsel %vm741, %v1251, 0.0
    %v1260 = vadd.f32 %v1258, %v1259
    %v1261 = vsel %vm741, %v1252, 0.0
    %v1262 = vadd.f32 %v1260, %v1261
    %v1263 = vsel %vm741, %v1253, 0.0
    %v1264 = vadd.f32 %v1262, %v1263
    %v1265 = vsel %vm741, %v1254, 0.0
    %v1266 = vadd.f32 %v1264, %v1265
    %v1267 = vsel %vm741, %v1255, 0.0
    %v1268 = vadd.f32 %v1266, %v1267
    %v1269 = vsel %vm741, %v1256, 0.0
    %v1270 = vadd.f32 %v1268, %v1269
    %v1271 = vsel %vm741, %v1257, 0.0
    %v1272 = vadd.f32 %v1270, %v1271
    %v1273 = vrot.slane %v1272, 4
    %v1274 = vadd.f32 %v1272, %v1273
    %v1275 = vrot.slane %v1274, 2
    %v1276 = vadd.f32 %v1274, %v1275
    %v1277 = vrot.slane %v1276, 1
    %v1278 = vadd.f32 %v1276, %v1277
    %v1279 = vmul.f32 %v1249, 0.015625
    %v1280 = vmul.f32 %v1278, 0.015625
    %v1281 = vmul.f32 %v1279, %v1279
    %v1282 = vsub.f32 %v1280, %v1281
    %v1283 = vmax.f32 %v1282, 0.0
    %v1284 = vsub.f32 %v1189, %v1279
    %v1285 = vsub.f32 %v1194, %v1279
    %v1286 = vsub.f32 %v1199, %v1279
    %v1287 = vsub.f32 %v1204, %v1279
    %v1288 = vsub.f32 %v1209, %v1279
    %v1289 = vsub.f32 %v1214, %v1279
    %v1290 = vsub.f32 %v1219, %v1279
    %v1291 = vsub.f32 %v1224, %v1279
    %v1292 = vadd.f32 %v1283, 1e-05
    %v1293 = vrsqrt.pop %v1292
    %v1294 = vmul.f32 %v1284, %v1293
    %v1295 = vmul.f32 %v1285, %v1293
    %v1296 = vmul.f32 %v1286, %v1293
    %v1297 = vmul.f32 %v1287, %v1293
    %v1298 = vmul.f32 %v1288, %v1293
    %v1299 = vmul.f32 %v1289, %v1293
    %v1300 = vmul.f32 %v1290, %v1293
    %v1301 = vmul.f32 %v1291, %v1293
    %v1303 = vlaneseq
    %v1304 = vshrl.u32 %v1303, 7
    %v1305 = vsub.s32 0, %v1304
    %v1306 = vrot.slane %v1227, %v1305
    %v1308 = vmul.f32 %v1294, %v1306
    %v1309 = vmul.f32 %v1295, %v1306
    %v1310 = vmul.f32 %v1296, %v1306
    %v1311 = vmul.f32 %v1297, %v1306
    %v1312 = vmul.f32 %v1298, %v1306
    %v1313 = vmul.f32 %v1299, %v1306
    %v1314 = vmul.f32 %v1300, %v1306
    %v1315 = vmul.f32 %v1301, %v1306
    %v1317 = vlaneseq
    %v1318 = vshrl.u32 %v1317, 7
    %v1319 = vsub.s32 0, %v1318
    %v1320 = vrot.slane %v1228, %v1319
    %v1322 = vadd.f32 %v1308, %v1320
    %v1323 = vadd.f32 %v1309, %v1320
    %v1324 = vadd.f32 %v1310, %v1320
    %v1325 = vadd.f32 %v1311, %v1320
    %v1326 = vadd.f32 %v1312, %v1320
    %v1327 = vadd.f32 %v1313, %v1320
    %v1328 = vadd.f32 %v1314, %v1320
    %v1329 = vadd.f32 %v1315, %v1320
    %v1330 = vmax.f32 %v1322, 0.0
    %v1331 = vmax.f32 %v1323, 0.0
    %v1332 = vmax.f32 %v1324, 0.0
    %v1333 = vmax.f32 %v1325, 0.0
    %v1334 = vmax.f32 %v1326, 0.0
    %v1335 = vmax.f32 %v1327, 0.0
    %v1336 = vmax.f32 %v1328, 0.0
    %v1337 = vmax.f32 %v1329, 0.0
    %v1338 = vld [vmem:[%s11] sm:$0xff]
    %v1339 = vld [vmem:[%s11 + $0x8] sm:$0xff]
    %v1340 = vld [vmem:[%s11 + $0x10] sm:$0xff]
    %v1341 = vld [vmem:[%s11 + $0x18] sm:$0xff]
    %v1342 = vld [vmem:[%s11 + $0x20] sm:$0xff]
    %v1343 = vld [vmem:[%s11 + $0x28] sm:$0xff]
    %v1344 = vld [vmem:[%s11 + $0x30] sm:$0xff]
    %v1345 = vld [vmem:[%s11 + $0x38] sm:$0xff]
    %v1346 = vld [vmem:[%s12] sm:$0xff]
    %1348 = vset.pattern.permute.xlu0 0
    %1349 = vperm.xlu0 %1348, %v1346
    %v1350 = vpop.permute.xlu0 %1349
    %1352 = vxpose.xlu0.b32.start [1/16] %v1338, 128
    %1353 = vxpose.xlu0.b32.cont [2/16] %v1339, 128
    %1354 = vxpose.xlu0.b32.cont [3/16] %v1340, 128
    %1355 = vxpose.xlu0.b32.cont [4/16] %v1341, 128
    %1356 = vxpose.xlu0.b32.cont [5/16] %v1342, 128
    %1357 = vxpose.xlu0.b32.cont [6/16] %v1343, 128
    %1358 = vxpose.xlu0.b32.cont [7/16] %v1344, 128
    %1359 = vxpose.xlu0.b32.cont [8/16] %v1345, 128
    %1360 = vxpose.xlu0.b32.cont [9/16] 0.0, 128
    %1361 = vxpose.xlu0.b32.cont [10/16] 0.0, 128
    %1362 = vxpose.xlu0.b32.cont [11/16] 0.0, 128
    %1363 = vxpose.xlu0.b32.cont [12/16] 0.0, 128
    %1364 = vxpose.xlu0.b32.cont [13/16] 0.0, 128
    %1365 = vxpose.xlu0.b32.cont [14/16] 0.0, 128
    %1366 = vxpose.xlu0.b32.cont [15/16] 0.0, 128
    %1367 = vxpose.xlu0.b32.end [16/16] 0.0, 128
    %v1368 = vpop.trf.xlu0
    %v1369 = vpop.trf.xlu0
    %v1370 = vpop.trf.xlu0
    %v1371 = vpop.trf.xlu0
    %v1372 = vpop.trf.xlu0
    %v1373 = vpop.trf.xlu0
    %v1374 = vpop.trf.xlu0
    %v1375 = vpop.trf.xlu0
    %v1376 = vpop.trf.xlu0
    %v1377 = vpop.trf.xlu0
    %v1378 = vpop.trf.xlu0
    %v1379 = vpop.trf.xlu0
    %v1380 = vpop.trf.xlu0
    %v1381 = vpop.trf.xlu0
    %v1382 = vpop.trf.xlu0
    %v1383 = vpop.trf.xlu0
    %v1385 = vsel %vm741, %v1368, 0
    %v1388 = vsel %vm741, %v1330, 0
    %v1391 = vsel %vm741, %v1331, 0
    %v1394 = vsel %vm741, %v1332, 0
    %v1397 = vsel %vm741, %v1333, 0
    %v1400 = vsel %vm741, %v1334, 0
    %v1403 = vsel %vm741, %v1335, 0
    %v1406 = vsel %vm741, %v1336, 0
    %v1409 = vsel %vm741, %v1337, 0
    %1411 = vmatprep.subr.mxu0 0.0
    %1412 = vmatpush1.xpose.msra.mxu0 %v1388
    %1413 = vmatprep.subr.mxu0 0.0
    %1414 = vmatpush1.xpose.msra.mxu0 %v1391
    %1415 = vmatprep.subr.mxu0 0.0
    %1416 = vmatpush1.xpose.msra.mxu0 %v1394
    %1417 = vmatprep.subr.mxu0 0.0
    %1418 = vmatpush1.xpose.msra.mxu0 %v1397
    %1419 = vmatprep.subr.mxu0 0.0
    %1420 = vmatpush1.xpose.msra.mxu0 %v1400
    %1421 = vmatprep.subr.mxu0 0.0
    %1422 = vmatpush1.xpose.msra.mxu0 %v1403
    %1423 = vmatprep.subr.mxu0 0.0
    %1424 = vmatpush1.xpose.msra.mxu0 %v1406
    %1425 = vmatprep.subr.mxu0 0.0
    %1426 = vmatpush1.xpose.msra.mxu0 %v1409
    %1427 = vmatprep.subr.mxu0 0.0
    %1428 = vmatpush1.xpose.msra.mxu0 0.0
    %1429 = vmatprep.subr.mxu0 0.0
    %1430 = vmatpush1.xpose.msra.mxu0 0.0
    %1431 = vmatprep.subr.mxu0 0.0
    %1432 = vmatpush1.xpose.msra.mxu0 0.0
    %1433 = vmatprep.subr.mxu0 0.0
    %1434 = vmatpush1.xpose.msra.mxu0 0.0
    %1435 = vmatprep.subr.mxu0 0.0
    %1436 = vmatpush1.xpose.msra.mxu0 0.0
    %1437 = vmatprep.subr.mxu0 0.0
    %1438 = vmatpush1.xpose.msra.mxu0 0.0
    %1439 = vmatprep.subr.mxu0 0.0
    %1440 = vmatpush1.xpose.msra.mxu0 0.0
    %1441 = vmatprep.subr.mxu0 0.0
    %1442 = vmatpush1.xpose.msra.mxu0 0.0
    %1443 = vmatprep.subr.mxu0 0.0
    %1444 = vmatpush1.xpose.msra.mxu0 0.0
    %1445 = vmatprep.subr.mxu0 0.0
    %1446 = vmatpush1.xpose.msra.mxu0 0.0
    %1447 = vmatprep.subr.mxu0 0.0
    %1448 = vmatpush1.xpose.msra.mxu0 0.0
    %1449 = vmatprep.subr.mxu0 0.0
    %1450 = vmatpush1.xpose.msra.mxu0 0.0
    %1451 = vmatprep.subr.mxu0 0.0
    %1452 = vmatpush1.xpose.msra.mxu0 0.0
    %1453 = vmatprep.subr.mxu0 0.0
    %1454 = vmatpush1.xpose.msra.mxu0 0.0
    %1455 = vmatprep.subr.mxu0 0.0
    %1456 = vmatpush1.xpose.msra.mxu0 0.0
    %1457 = vmatprep.subr.mxu0 0.0
    %1458 = vmatpush1.xpose.msra.mxu0 0.0
    %1459 = vmatprep.subr.mxu0 0.0
    %1460 = vmatpush1.xpose.msra.mxu0 0.0
    %1461 = vmatprep.subr.mxu0 0.0
    %1462 = vmatpush1.xpose.msra.mxu0 0.0
    %1463 = vmatprep.subr.mxu0 0.0
    %1464 = vmatpush1.xpose.msra.mxu0 0.0
    %1465 = vmatprep.subr.mxu0 0.0
    %1466 = vmatpush1.xpose.msra.mxu0 0.0
    %1467 = vmatprep.subr.mxu0 0.0
    %1468 = vmatpush1.xpose.msra.mxu0 0.0
    %1469 = vmatprep.subr.mxu0 0.0
    %1470 = vmatpush1.xpose.msra.mxu0 0.0
    %1471 = vmatprep.subr.mxu0 0.0
    %1472 = vmatpush1.xpose.msra.mxu0 0.0
    %1473 = vmatprep.subr.mxu0 0.0
    %1474 = vmatpush1.xpose.msra.mxu0 0.0
    %1475 = vmatprep.mubr.f32.mxu0 0.0
    %1476 = vmatmul.mubr.f32.gmra.mrb[0].mxu0 %v1385
    %v1477 = vpop.f32.mrb[0].mxu0
    %v1478 = vadd.f32 %v1350, %v1477
    %v1479 = vpop.f32.mrb[0].mxu0
    %1480 = vdwg.mxu0
    %1481 = vst.msk [vmem:[%s13] sm:$0xff] %vm741, %v1478
  $region61: #{hgcn_forward.2} parent=0 // pred_fallthru
    _
  // Predicated region
  $region62: #{hgcn_forward.2} parent=0 // pred_check
    _
  $region63: #{hgcn_forward.2} parent=0 // pred_check_branch
    %1483 = sbr.rel (0) target = $region65
  $region64: #{hgcn_forward.2} parent=0 // pred_region
    _
  $region65: #{hgcn_forward.2} parent=0 // pred_fallthru
    _
  // Predicated region
  $region66: #{hgcn_forward.2} parent=0 // pred_check
    _
  $region67: #{hgcn_forward.2} parent=0 // pred_check_branch
    %1485 = sbr.rel (0) target = $region69
  $region68: #{hgcn_forward.2} parent=0 // pred_region
    _
  $region69: #{hgcn_forward.2} parent=0 // pred_fallthru
    _

</llo_original>
